<compile_context>
chip_gen: v5e
topology: v5e:2x2
jax: 0.10.0
libtpu: 0.0.40
codegen_flags: <defaults>
</compile_context>

<pallas_src>
import jax
import jax.numpy as jnp
from jax.experimental import pallas as pl
from jax.experimental.pallas import tpu as pltpu


# ----------------------------------------------------------------------------
# Fused kernel: channel-mean + truncated-DFT matmul -> phase -> MLP head
# ----------------------------------------------------------------------------
def _bfc_fused_kernel(x_ref, m_ref, img_ref, txt_ref,
                      w1i_ref, w1t_ref, w1f_ref, b1_ref, w2_ref, b2_ref,
                      out_ref):
    fft_dim = m_ref.shape[1] // 2

    # Grayscale channel mean: cheap in-kernel sum over C (1/C folded into M).
    gray = jnp.sum(x_ref[...], axis=1)                     # (B, H*W), fp32

    # Truncated fft2 as one fp32 matmul: (B, H*W) @ (H*W, 2*fft_dim) = [Re|Im]
    # of exactly the first fft_dim row-major bins of fft2(mean_C(x)).
    bins = jnp.dot(gray, m_ref[...], preferred_element_type=jnp.float32)
    re = bins[:, :fft_dim]
    im = bins[:, fft_dim:]
    phase = jnp.arctan2(im, re)   # == torch.angle(fft2(gray)).view(B,-1)[:, :fft_dim]

    # mlp_fusion: Linear -> ReLU -> Linear.  W1 arrives pre-split into the
    # three feature-group blocks (identical to concatenating [img|txt|phase]
    # first).  Matmul operands bf16, accumulation fp32.
    h = jnp.dot(img_ref[...], w1i_ref[...], preferred_element_type=jnp.float32)
    h = h + jnp.dot(txt_ref[...], w1t_ref[...], preferred_element_type=jnp.float32)
    h = h + jnp.dot(phase.astype(w1f_ref.dtype), w1f_ref[...],
                    preferred_element_type=jnp.float32)
    h = jnp.maximum(h + b1_ref[...], 0.0)                  # fp32 elementwise
    out = jnp.dot(h, w2_ref[...], preferred_element_type=jnp.float32) + b2_ref[...]
    out_ref[...] = out.astype(out_ref.dtype)


def build_phase_dft_matrix(C, H, W, fft_dim):
    """Real (H*W, 2*fft_dim) matrix M with gray(B, H*W) @ M =
    [Re | Im] of the first `fft_dim` row-major bins of fft2(gray), where
    gray = mean over C (the 1/C factor is folded into M and the channel sum
    is done in-kernel).  Column f corresponds to FFT bin (f // W, f % W),
    i.e. exactly phase.view(B, -1)[:, f] in the PyTorch reference — correct
    for any H, W, fft_dim <= H*W."""
    f = jnp.arange(fft_dim)
    r = (f // W).astype(jnp.float32)          # FFT row of kept bin f
    wc = (f % W).astype(jnp.float32)          # FFT col of kept bin f
    h = jnp.arange(H, dtype=jnp.float32)
    v = jnp.arange(W, dtype=jnp.float32)
    # exp(-2*pi*i*(r*h/H + w*v/W)) = cos(ang) + i*sin(ang), ang already negated.
    ang = -2.0 * jnp.pi * (h[:, None, None] * r[None, None, :] / H
                           + v[None, :, None] * wc[None, None, :] / W)
    ang = ang.reshape(H * W, fft_dim)
    return jnp.concatenate([jnp.cos(ang), jnp.sin(ang)], axis=1) / C   # fold 1/C


def bfc_fused_forward(x3, m, img, txt, w1i, w1t, w1f, b1, w2, b2):
    B, C, HW = x3.shape
    two_fft = m.shape[1]
    d_img = img.shape[1]
    d_txt = txt.shape[1]
    d_fft = w1f.shape[0]
    dh = w1i.shape[1]
    nc = w2.shape[1]
    return pl.pallas_call(
        _bfc_fused_kernel,
        out_shape=jax.ShapeDtypeStruct((B, nc), jnp.float32),
        grid_spec=pltpu.PrefetchScalarGridSpec(
            num_scalar_prefetch=0,
            grid=(1,),      # whole problem in one block: weight DMA dominates,
                            # splitting the tiny batch would only re-DMA W1.
            in_specs=[
                pl.BlockSpec((B, C, HW), lambda i: (0, 0, 0)),
                pl.BlockSpec((HW, two_fft), lambda i: (0, 0)),
                pl.BlockSpec((B, d_img), lambda i: (0, 0)),
                pl.BlockSpec((B, d_txt), lambda i: (0, 0)),
                pl.BlockSpec((d_img, dh), lambda i: (0, 0)),
                pl.BlockSpec((d_txt, dh), lambda i: (0, 0)),
                pl.BlockSpec((d_fft, dh), lambda i: (0, 0)),
                pl.BlockSpec((1, dh), lambda i: (0, 0)),
                pl.BlockSpec((dh, nc), lambda i: (0, 0)),
                pl.BlockSpec((1, nc), lambda i: (0, 0)),
            ],
            out_specs=pl.BlockSpec((B, nc), lambda i: (0, 0)),
        ),
        compiler_params=pltpu.CompilerParams(
            dimension_semantics=("arbitrary",)),
    )(x3, m, img, txt, w1i, w1t, w1f, b1, w2, b2)


# ----------------------------------------------------------------------------
# Module wrapper (parameter setup + cached DFT-matrix constant)
# ----------------------------------------------------------------------------
class BFCClassifierPallas:
    def __init__(self, num_classes=3, hidden_dim=256, *, key):
        self.fft_dim = 128
        self.image_dim = 512    # CLIP projection_dim
        self.text_dim = 512     # CLIP projection_dim
        self.num_classes = num_classes
        d_in = self.image_dim + self.text_dim + self.fft_dim     # 1152

        k1, k2, k3, k4 = jax.random.split(key, 4)
        # PyTorch nn.Linear default init: U(-1/sqrt(fan_in), 1/sqrt(fan_in)).
        lim1 = 1.0 / (d_in ** 0.5)
        lim2 = 1.0 / (hidden_dim ** 0.5)
        # (in, out) layout == transposed nn.Linear weight; biases kept 2-D.
        self.w1 = jax.random.uniform(k1, (d_in, hidden_dim), jnp.float32, -lim1, lim1)
        self.b1 = jax.random.uniform(k2, (1, hidden_dim), jnp.float32, -lim1, lim1)
        self.w2 = jax.random.uniform(k3, (hidden_dim, num_classes), jnp.float32, -lim2, lim2)
        self.b2 = jax.random.uniform(k4, (1, num_classes), jnp.float32, -lim2, lim2)

        # bf16 kernel copies of W1, pre-split by feature group (halves the
        # dominant DMA and guarantees no in-kernel slice relayout).
        self.w1_img = self.w1[:self.image_dim].astype(jnp.bfloat16)
        self.w1_txt = self.w1[self.image_dim:self.image_dim + self.text_dim].astype(jnp.bfloat16)
        self.w1_fft = self.w1[self.image_dim + self.text_dim:].astype(jnp.bfloat16)

        self._dft_cache = {}    # (C, H, W) -> grayscale+DFT matrix (hoisted)

    def _dft_matrix(self, C, H, W):
        k = (C, H, W)
        if k not in self._dft_cache:
            assert self.fft_dim <= H * W, "fft_dim must not exceed H*W"
            self._dft_cache[k] = build_phase_dft_matrix(C, H, W, self.fft_dim)
        return self._dft_cache[k]

    def forward(self, x, image_features, text_features):
        # x: (B, C, H, W) float32 (NCHW, like PyTorch).
        B, C, H, W = x.shape
        m = self._dft_matrix(C, H, W)
        x3 = x.astype(jnp.float32).reshape(B, C, H * W)      # free row-major collapse
        img = image_features.astype(jnp.bfloat16)            # pure-bf16 MXU path
        txt = text_features.astype(jnp.bfloat16)
        return bfc_fused_forward(x3, m, img, txt,
                                 self.w1_img, self.w1_txt, self.w1_fft,
                                 self.b1, self.w2, self.b2)


# ----------------------------------------------------------------------------
# Pure-JAX reference (fp32, for the functional correctness check)
# ----------------------------------------------------------------------------
def _reference_forward(x, img, txt, w1, b1, w2, b2, fft_dim):
    gray = jnp.mean(x, axis=1)
    phase = jnp.angle(jnp.fft.fft2(gray))
    feat = jnp.concatenate(
        [img, txt, phase.reshape(x.shape[0], -1)[:, :fft_dim]], axis=1)
    hp = jax.lax.Precision.HIGHEST
    h = jnp.maximum(jnp.dot(feat, w1, precision=hp) + b1, 0.0)
    return jnp.dot(h, w2, precision=hp) + b2


if __name__ == "__main__":
    key = jax.random.PRNGKey(0)
    kx, ki, kt, kp = jax.random.split(key, 4)

    B, C, H, W = 2, 4, 16, 16
    x = jax.random.uniform(kx, (B, C, H, W), jnp.float32)

    # Deterministic stand-ins for the frozen CLIP image / text embeddings.
    image_features = jax.random.normal(ki, (B, 512), jnp.float32)
    text_features = jax.random.normal(kt, (B, 512), jnp.float32)

    model = BFCClassifierPallas(num_classes=3, hidden_dim=256, key=kp)
    out = model.forward(x, image_features, text_features)
    out = jax.block_until_ready(out)

    assert out.shape == (B, 3) and out.dtype == jnp.float32
    ref = _reference_forward(x, image_features, text_features,
                             model.w1, model.b1, model.w2, model.b2,
                             model.fft_dim)
    assert jnp.allclose(out, ref, rtol=2e-2, atol=2e-2), (out, ref)
    print("KERNEL_OK")
</pallas_src>

<mosaic_0001>
module attributes {stable_mosaic.version = 11 : i64} {
  func.func @_bfc_fused_kernel(%arg0: i32, %arg1: memref<2x4x256xf32, #tpu.memory_space<vmem>>, %arg2: memref<256x256xf32, #tpu.memory_space<vmem>>, %arg3: memref<2x512xbf16, #tpu.memory_space<vmem>>, %arg4: memref<2x512xbf16, #tpu.memory_space<vmem>>, %arg5: memref<512x256xbf16, #tpu.memory_space<vmem>>, %arg6: memref<512x256xbf16, #tpu.memory_space<vmem>>, %arg7: memref<128x256xbf16, #tpu.memory_space<vmem>>, %arg8: memref<1x256xf32, #tpu.memory_space<vmem>>, %arg9: memref<256x3xf32, #tpu.memory_space<vmem>>, %arg10: memref<1x3xf32, #tpu.memory_space<vmem>>, %arg11: memref<2x3xf32, #tpu.memory_space<vmem>>) attributes {dimension_semantics = [#tpu.dimension_semantics<arbitrary>], iteration_bounds = array<i64: 1>, scalar_prefetch = 0 : i64, scratch_operands = 0 : i64, tpu.core_type = #tpu.core_type<tc>, window_params = [{pipeline_mode = #tpu.pipeline_mode<synchronous>, transform_indices = @transform_0, window_bounds = array<i64: 2, 4, 256>}, {pipeline_mode = #tpu.pipeline_mode<synchronous>, transform_indices = @transform_1, window_bounds = array<i64: 256, 256>}, {pipeline_mode = #tpu.pipeline_mode<synchronous>, transform_indices = @transform_2, window_bounds = array<i64: 2, 512>}, {pipeline_mode = #tpu.pipeline_mode<synchronous>, transform_indices = @transform_3, window_bounds = array<i64: 2, 512>}, {pipeline_mode = #tpu.pipeline_mode<synchronous>, transform_indices = @transform_4, window_bounds = array<i64: 512, 256>}, {pipeline_mode = #tpu.pipeline_mode<synchronous>, transform_indices = @transform_5, window_bounds = array<i64: 512, 256>}, {pipeline_mode = #tpu.pipeline_mode<synchronous>, transform_indices = @transform_6, window_bounds = array<i64: 128, 256>}, {pipeline_mode = #tpu.pipeline_mode<synchronous>, transform_indices = @transform_7, window_bounds = array<i64: 1, 256>}, {pipeline_mode = #tpu.pipeline_mode<synchronous>, transform_indices = @transform_8, window_bounds = array<i64: 256, 3>}, {pipeline_mode = #tpu.pipeline_mode<synchronous>, transform_indices = @transform_9, window_bounds = array<i64: 1, 3>}, {pipeline_mode = #tpu.pipeline_mode<synchronous>, transform_indices = @transform_10, window_bounds = array<i64: 2, 3>}]} {
    %c0 = arith.constant 0 : index
    %c0_0 = arith.constant 0 : index
    %c0_1 = arith.constant 0 : index
    %0 = vector.load %arg1[%c0, %c0_0, %c0_1] : memref<2x4x256xf32, #tpu.memory_space<vmem>>, vector<2x4x256xf32>
    %cst = arith.constant dense<0.000000e+00> : vector<2x256xf32>
    %1 = vector.multi_reduction <add>, %0, %cst [1] : vector<2x4x256xf32> to vector<2x256xf32>
    %c0_2 = arith.constant 0 : index
    %c0_3 = arith.constant 0 : index
    %2 = vector.load %arg2[%c0_2, %c0_3] : memref<256x256xf32, #tpu.memory_space<vmem>>, vector<256x256xf32>
    %cst_4 = arith.constant dense<0.000000e+00> : vector<2x256xf32>
    %3 = tpu.matmul %1, %2, %cst_4 {dimension_numbers = #tpu.dot_dimension_numbers<[1], [0], [0], [1], [0, 0, 1, 1], [], []>} : vector<2x256xf32>, vector<256x256xf32>, vector<2x256xf32> -> vector<2x256xf32>
    %4 = vector.extract_strided_slice %3 {offsets = [0, 0], sizes = [2, 128], strides = [1, 1]} : vector<2x256xf32> to vector<2x128xf32>
    %5 = vector.extract_strided_slice %3 {offsets = [0, 128], sizes = [2, 128], strides = [1, 1]} : vector<2x256xf32> to vector<2x128xf32>
    %6 = math.atan2 %5, %4 : vector<2x128xf32>
    %c0_5 = arith.constant 0 : index
    %c0_6 = arith.constant 0 : index
    %7 = vector.load %arg3[%c0_5, %c0_6] : memref<2x512xbf16, #tpu.memory_space<vmem>>, vector<2x512xbf16>
    %c0_7 = arith.constant 0 : index
    %c0_8 = arith.constant 0 : index
    %8 = vector.load %arg5[%c0_7, %c0_8] : memref<512x256xbf16, #tpu.memory_space<vmem>>, vector<512x256xbf16>
    %cst_9 = arith.constant dense<0.000000e+00> : vector<2x256xf32>
    %9 = tpu.matmul %7, %8, %cst_9 {dimension_numbers = #tpu.dot_dimension_numbers<[1], [0], [0], [1], [0, 0, 1, 1], [], []>} : vector<2x512xbf16>, vector<512x256xbf16>, vector<2x256xf32> -> vector<2x256xf32>
    %c0_10 = arith.constant 0 : index
    %c0_11 = arith.constant 0 : index
    %10 = vector.load %arg4[%c0_10, %c0_11] : memref<2x512xbf16, #tpu.memory_space<vmem>>, vector<2x512xbf16>
    %c0_12 = arith.constant 0 : index
    %c0_13 = arith.constant 0 : index
    %11 = vector.load %arg6[%c0_12, %c0_13] : memref<512x256xbf16, #tpu.memory_space<vmem>>, vector<512x256xbf16>
    %cst_14 = arith.constant dense<0.000000e+00> : vector<2x256xf32>
    %12 = tpu.matmul %10, %11, %cst_14 {dimension_numbers = #tpu.dot_dimension_numbers<[1], [0], [0], [1], [0, 0, 1, 1], [], []>} : vector<2x512xbf16>, vector<512x256xbf16>, vector<2x256xf32> -> vector<2x256xf32>
    %13 = arith.addf %9, %12 : vector<2x256xf32>
    %14 = arith.truncf %6 : vector<2x128xf32> to vector<2x128xbf16>
    %c0_15 = arith.constant 0 : index
    %c0_16 = arith.constant 0 : index
    %15 = vector.load %arg7[%c0_15, %c0_16] : memref<128x256xbf16, #tpu.memory_space<vmem>>, vector<128x256xbf16>
    %cst_17 = arith.constant dense<0.000000e+00> : vector<2x256xf32>
    %16 = tpu.matmul %14, %15, %cst_17 {dimension_numbers = #tpu.dot_dimension_numbers<[1], [0], [0], [1], [0, 0, 1, 1], [], []>} : vector<2x128xbf16>, vector<128x256xbf16>, vector<2x256xf32> -> vector<2x256xf32>
    %17 = arith.addf %13, %16 : vector<2x256xf32>
    %c0_18 = arith.constant 0 : index
    %c0_19 = arith.constant 0 : index
    %18 = vector.load %arg8[%c0_18, %c0_19] : memref<1x256xf32, #tpu.memory_space<vmem>>, vector<1x256xf32>
    %19 = vector.broadcast %18 : vector<1x256xf32> to vector<2x256xf32>
    %20 = arith.addf %17, %19 : vector<2x256xf32>
    %cst_20 = arith.constant 0.000000e+00 : f32
    %21 = vector.broadcast %cst_20 : f32 to vector<2x256xf32>
    %22 = arith.maximumf %20, %21 : vector<2x256xf32>
    %c0_21 = arith.constant 0 : index
    %c0_22 = arith.constant 0 : index
    %23 = vector.load %arg9[%c0_21, %c0_22] : memref<256x3xf32, #tpu.memory_space<vmem>>, vector<256x3xf32>
    %cst_23 = arith.constant dense<0.000000e+00> : vector<2x3xf32>
    %24 = tpu.matmul %22, %23, %cst_23 {dimension_numbers = #tpu.dot_dimension_numbers<[1], [0], [0], [1], [0, 0, 1, 1], [], []>} : vector<2x256xf32>, vector<256x3xf32>, vector<2x3xf32> -> vector<2x3xf32>
    %c0_24 = arith.constant 0 : index
    %c0_25 = arith.constant 0 : index
    %25 = vector.load %arg10[%c0_24, %c0_25] : memref<1x3xf32, #tpu.memory_space<vmem>>, vector<1x3xf32>
    %26 = vector.broadcast %25 : vector<1x3xf32> to vector<2x3xf32>
    %27 = arith.addf %24, %26 : vector<2x3xf32>
    %c0_26 = arith.constant 0 : index
    %c0_27 = arith.constant 0 : index
    %28 = vector.load %arg11[%c0_26, %c0_27] : memref<2x3xf32, #tpu.memory_space<vmem>>, vector<2x3xf32>
    tpu.vector_store %arg11[%c0_26, %c0_27], %27 {strides = array<i32>} : memref<2x3xf32, #tpu.memory_space<vmem>>, vector<2x3xf32>,
    return
  }
  func.func @transform_0(%arg0: i32) -> (i32, i32, i32) {
    %c0_i32 = arith.constant 0 : i32
    %c0_i32_0 = arith.constant 0 : i32
    %c0_i32_1 = arith.constant 0 : i32
    %c0_i32_2 = arith.constant 0 : i32
    return %c0_i32, %c0_i32_0, %c0_i32_1 : i32, i32, i32
  }
  func.func @transform_1(%arg0: i32) -> (i32, i32) {
    %c0_i32 = arith.constant 0 : i32
    %c0_i32_0 = arith.constant 0 : i32
    %c0_i32_1 = arith.constant 0 : i32
    return %c0_i32, %c0_i32_0 : i32, i32
  }
  func.func @transform_2(%arg0: i32) -> (i32, i32) {
    %c0_i32 = arith.constant 0 : i32
    %c0_i32_0 = arith.constant 0 : i32
    %c0_i32_1 = arith.constant 0 : i32
    return %c0_i32, %c0_i32_0 : i32, i32
  }
  func.func @transform_3(%arg0: i32) -> (i32, i32) {
    %c0_i32 = arith.constant 0 : i32
    %c0_i32_0 = arith.constant 0 : i32
    %c0_i32_1 = arith.constant 0 : i32
    return %c0_i32, %c0_i32_0 : i32, i32
  }
  func.func @transform_4(%arg0: i32) -> (i32, i32) {
    %c0_i32 = arith.constant 0 : i32
    %c0_i32_0 = arith.constant 0 : i32
    %c0_i32_1 = arith.constant 0 : i32
    return %c0_i32, %c0_i32_0 : i32, i32
  }
  func.func @transform_5(%arg0: i32) -> (i32, i32) {
    %c0_i32 = arith.constant 0 : i32
    %c0_i32_0 = arith.constant 0 : i32
    %c0_i32_1 = arith.constant 0 : i32
    return %c0_i32, %c0_i32_0 : i32, i32
  }
  func.func @transform_6(%arg0: i32) -> (i32, i32) {
    %c0_i32 = arith.constant 0 : i32
    %c0_i32_0 = arith.constant 0 : i32
    %c0_i32_1 = arith.constant 0 : i32
    return %c0_i32, %c0_i32_0 : i32, i32
  }
  func.func @transform_7(%arg0: i32) -> (i32, i32) {
    %c0_i32 = arith.constant 0 : i32
    %c0_i32_0 = arith.constant 0 : i32
    %c0_i32_1 = arith.constant 0 : i32
    return %c0_i32, %c0_i32_0 : i32, i32
  }
  func.func @transform_8(%arg0: i32) -> (i32, i32) {
    %c0_i32 = arith.constant 0 : i32
    %c0_i32_0 = arith.constant 0 : i32
    %c0_i32_1 = arith.constant 0 : i32
    return %c0_i32, %c0_i32_0 : i32, i32
  }
  func.func @transform_9(%arg0: i32) -> (i32, i32) {
    %c0_i32 = arith.constant 0 : i32
    %c0_i32_0 = arith.constant 0 : i32
    %c0_i32_1 = arith.constant 0 : i32
    return %c0_i32, %c0_i32_0 : i32, i32
  }
  func.func @transform_10(%arg0: i32) -> (i32, i32) {
    %c0_i32 = arith.constant 0 : i32
    %c0_i32_0 = arith.constant 0 : i32
    %c0_i32_1 = arith.constant 0 : i32
    return %c0_i32, %c0_i32_0 : i32, i32
  }
}

</mosaic_0001>

<llo_original>
// kernel: tpu_custom_call.1
$region0: #{tpu_custom_call.1}
  #allocation0 [shape = 'u32[]', space=smem, size = 0x4, offset = 0x4, fixed_abs, tag = 'smem constant byte address 0x4 - core index']
  #allocation1 [shape = 'u32[72,128]{1,0:T(1,128)}', space=vmem, size = 0x9000, scoped, tag = 'internal scratch']
  %s0 = inlined_call_operand.vmem [shape: f32[2,4,256], index: 0, kind: input, shape index: {}]
  %s1 = inlined_call_operand.hbm [shape: f32[256,256], index: 1, kind: input, shape index: {}]
  %s2 = inlined_call_operand.vmem [shape: bf16[2,512], index: 2, kind: input, shape index: {}]
  %s3 = inlined_call_operand.vmem [shape: bf16[2,512], index: 3, kind: input, shape index: {}]
  %s4 = inlined_call_operand.hbm [shape: bf16[512,256], index: 4, kind: input, shape index: {}]
  %s5 = inlined_call_operand.hbm [shape: bf16[512,256], index: 5, kind: input, shape index: {}]
  %s6 = inlined_call_operand.vmem [shape: bf16[128,256], index: 6, kind: input, shape index: {}]
  %s7 = inlined_call_operand.vmem [shape: f32[1,256], index: 7, kind: input, shape index: {}]
  %s8 = inlined_call_operand.vmem [shape: f32[256,3], index: 8, kind: input, shape index: {}]
  %s9 = inlined_call_operand.vmem [shape: f32[1,3], index: 9, kind: input, shape index: {}]
  %s10 = inlined_call_operand.hbm [shape: f32[2,3], index: 10, kind: output, shape index: {}]
  %s11 = sld [smem:[#allocation0]]
  $region62: #{tpu_custom_call.1} parent=0
    _
  %s13 = ssub.s32 1, %s11
  %s14 = scalar_select 0, %s13, %s11
  $region1: #{tpu_custom_call.1} parent=0
    #allocation2 [shape = 'u8[262144]{0}', space=vmem, size = 0x40000, scoped, tag = 'input window, operand 1, single buffered']
    #allocation3 [shape = 's32[1]{0}', space=sflag, size = 0x4, scoped, tag = 'scoped memory for tpu_custom_call.1']
    #allocation4 [shape = 's32[1]{0}', space=sflag, size = 0x4, scoped, tag = 'scoped memory for tpu_custom_call.1']
    #allocation5 [shape = 'u8[262144]{0}', space=vmem, size = 0x40000, scoped, tag = 'input window, operand 4, single buffered']
    #allocation6 [shape = 's32[1]{0}', space=sflag, size = 0x4, scoped, tag = 'scoped memory for tpu_custom_call.1']
    #allocation7 [shape = 'u8[262144]{0}', space=vmem, size = 0x40000, scoped, tag = 'input window, operand 5, single buffered']
    #allocation8 [shape = 'u8[1024]{0}', space=vmem, size = 0x400, scoped, tag = 'output window, operand 0, single buffered']
    %15 = vsyncpa [#allocation3], 0
    %16 = vsyncpa [#allocation6], 0
    %17 = vsyncpa [#allocation4], 0
    // Predicated region
    $region2: #{tpu_custom_call.1} parent=1 // pred_check
      _
    $region3: #{tpu_custom_call.1} parent=1 // pred_check_branch
      %19 = sbr.rel (0) target = $region5
    $region4: #{tpu_custom_call.1} parent=1 // pred_region
      _
    $region5: #{tpu_custom_call.1} parent=1 // pred_fallthru
      _
    // Predicated region
    $region6: #{tpu_custom_call.1} parent=1 // pred_check
      _
    $region7: #{tpu_custom_call.1} parent=1 // pred_check_branch
      %21 = sbr.rel (0) target = $region9
    $region8: #{tpu_custom_call.1} parent=1 // pred_region
      %23 = vsyncadd [#allocation3], 0
      %s24 = sshll.u32 %s1, 4
      %s25 = int_to_ptr.hbm [resolvable:$true] %s24
      %s26 = sshll.u32 [#allocation2], 4
      %s27 = int_to_ptr.vmem [resolvable:$true] %s26
      %32 = dma.hbm_to_vmem [thread:$0]  %s25, 8192, %s27, [#allocation3], 256, 256, 16
    $region9: #{tpu_custom_call.1} parent=1 // pred_fallthru
      _
    // Predicated region
    $region10: #{tpu_custom_call.1} parent=1 // pred_check
      _
    $region11: #{tpu_custom_call.1} parent=1 // pred_check_branch
      %34 = sbr.rel (0) target = $region13
    $region12: #{tpu_custom_call.1} parent=1 // pred_region
      _
    $region13: #{tpu_custom_call.1} parent=1 // pred_fallthru
      _
    // Predicated region
    $region14: #{tpu_custom_call.1} parent=1 // pred_check
      _
    $region15: #{tpu_custom_call.1} parent=1 // pred_check_branch
      %36 = sbr.rel (0) target = $region17
    $region16: #{tpu_custom_call.1} parent=1 // pred_region
      _
    $region17: #{tpu_custom_call.1} parent=1 // pred_fallthru
      _
    // Predicated region
    $region18: #{tpu_custom_call.1} parent=1 // pred_check
      _
    $region19: #{tpu_custom_call.1} parent=1 // pred_check_branch
      %38 = sbr.rel (0) target = $region21
    $region20: #{tpu_custom_call.1} parent=1 // pred_region
      %40 = vsyncadd [#allocation6], 0
      %s41 = sshll.u32 %s4, 4
      %s42 = int_to_ptr.hbm [resolvable:$true] %s41
      %s43 = sshll.u32 [#allocation5], 4
      %s44 = int_to_ptr.vmem [resolvable:$true] %s43
      %49 = dma.hbm_to_vmem [thread:$0]  %s42, 8192, %s44, [#allocation6], 128, 128, 8
    $region21: #{tpu_custom_call.1} parent=1 // pred_fallthru
      _
    // Predicated region
    $region22: #{tpu_custom_call.1} parent=1 // pred_check
      _
    $region23: #{tpu_custom_call.1} parent=1 // pred_check_branch
      %51 = sbr.rel (0) target = $region25
    $region24: #{tpu_custom_call.1} parent=1 // pred_region
      %53 = vsyncadd [#allocation6], 0
      %s54 = sshll.u32 %s5, 4
      %s55 = int_to_ptr.hbm [resolvable:$true] %s54
      %s56 = sshll.u32 [#allocation7], 4
      %s57 = int_to_ptr.vmem [resolvable:$true] %s56
      %62 = dma.hbm_to_vmem [thread:$0]  %s55, 8192, %s57, [#allocation6], 128, 128, 8
    $region25: #{tpu_custom_call.1} parent=1 // pred_fallthru
      _
    // Predicated region
    $region26: #{tpu_custom_call.1} parent=1 // pred_check
      _
    $region27: #{tpu_custom_call.1} parent=1 // pred_check_branch
      %64 = sbr.rel (0) target = $region29
    $region28: #{tpu_custom_call.1} parent=1 // pred_region
      _
    $region29: #{tpu_custom_call.1} parent=1 // pred_fallthru
      _
    // Predicated region
    $region30: #{tpu_custom_call.1} parent=1 // pred_check
      _
    $region31: #{tpu_custom_call.1} parent=1 // pred_check_branch
      %66 = sbr.rel (0) target = $region33
    $region32: #{tpu_custom_call.1} parent=1 // pred_region
      _
    $region33: #{tpu_custom_call.1} parent=1 // pred_fallthru
      _
    // Predicated region
    $region34: #{tpu_custom_call.1} parent=1 // pred_check
      _
    $region35: #{tpu_custom_call.1} parent=1 // pred_check_branch
      %68 = sbr.rel (0) target = $region37
    $region36: #{tpu_custom_call.1} parent=1 // pred_region
      _
    $region37: #{tpu_custom_call.1} parent=1 // pred_fallthru
      _
    // Predicated region
    $region38: #{tpu_custom_call.1} parent=1 // pred_check
      _
    $region39: #{tpu_custom_call.1} parent=1 // pred_check_branch
      %70 = sbr.rel (0) target = $region41
    $region40: #{tpu_custom_call.1} parent=1 // pred_region
      _
    $region41: #{tpu_custom_call.1} parent=1 // pred_fallthru
      _
    // Predicated region
    $region42: #{tpu_custom_call.1} parent=1 // pred_check
      _
    $region43: #{tpu_custom_call.1} parent=1 // pred_check_branch
      %72 = sbr.rel (0) target = $region45
    $region44: #{tpu_custom_call.1} parent=1 // pred_region
      %74 = dma.done [#allocation3], 8192
    $region45: #{tpu_custom_call.1} parent=1 // pred_fallthru
      _
    // Predicated region
    $region46: #{tpu_custom_call.1} parent=1 // pred_check
      _
    $region47: #{tpu_custom_call.1} parent=1 // pred_check_branch
      %76 = sbr.rel (0) target = $region49
    $region48: #{tpu_custom_call.1} parent=1 // pred_region
      %78 = dma.done [#allocation6], 8192
    $region49: #{tpu_custom_call.1} parent=1 // pred_fallthru
      _
    // Predicated region
    $region50: #{tpu_custom_call.1} parent=1 // pred_check
      _
    $region51: #{tpu_custom_call.1} parent=1 // pred_check_branch
      %80 = sbr.rel (0) target = $region53
    $region52: #{tpu_custom_call.1} parent=1 // pred_region
      %82 = dma.done [#allocation6], 8192
    $region53: #{tpu_custom_call.1} parent=1 // pred_fallthru
      _
    %v83 = vld [vmem:[%s0] sm:$0xff]
    %v84 = vld [vmem:[%s0 + $0x8] sm:$0xff]
    %87 = vst [vmem:[#allocation1] ss:$2 sm:$0xff] %v83
    %v88 = vld.sshfl [vmem:[#allocation1] sm:$0xff pattern:$0x75316420]
    %v89 = vld.sshfl [vmem:[#allocation1 + $0x8] sm:$0xff pattern:$0x75316420]
    %s90 = scalar_lea.vmem [#allocation1], 16
    %91 = vst [vmem:[%s90] ss:$2 sm:$0xff] %v84
    %v92 = vld.sshfl [vmem:[#allocation1 + $0x10] sm:$0xff pattern:$0x75316420]
    %v93 = vld.sshfl [vmem:[#allocation1 + $0x18] sm:$0xff pattern:$0x75316420]
    %vm98 = vcmask 1043456
    %v99 = vsel %vm98, %v88, 0.0
    %v100 = vrot.slane %v99, 4
    %v101 = vadd.f32 %v99, %v100
    %v102 = vrot.slane %v101, 2
    %v103 = vadd.f32 %v101, %v102
    %v104 = vrot.slane %v103, 1
    %v105 = vadd.f32 %v103, %v104
    %v106 = vsel %vm98, %v89, 0.0
    %v107 = vrot.slane %v106, 4
    %v108 = vadd.f32 %v106, %v107
    %v109 = vrot.slane %v108, 2
    %v110 = vadd.f32 %v108, %v109
    %v111 = vrot.slane %v110, 1
    %v112 = vadd.f32 %v110, %v111
    %v113 = vsel %vm98, %v92, 0.0
    %v114 = vrot.slane %v113, 4
    %v115 = vadd.f32 %v113, %v114
    %v116 = vrot.slane %v115, 2
    %v117 = vadd.f32 %v115, %v116
    %v118 = vrot.slane %v117, 1
    %v119 = vadd.f32 %v117, %v118
    %v120 = vsel %vm98, %v93, 0.0
    %v121 = vrot.slane %v120, 4
    %v122 = vadd.f32 %v120, %v121
    %v123 = vrot.slane %v122, 2
    %v124 = vadd.f32 %v122, %v123
    %v125 = vrot.slane %v124, 1
    %v126 = vadd.f32 %v124, %v125
    %v127 = vld [vmem:[#allocation2] sm:$0xff]
    %v128 = vld [vmem:[#allocation2 + $0x8] sm:$0xff]
    %v129 = vld [vmem:[#allocation2 + $0x10] sm:$0xff]
    %v130 = vld [vmem:[#allocation2 + $0x18] sm:$0xff]
    %v131 = vld [vmem:[#allocation2 + $0x20] sm:$0xff]
    %v132 = vld [vmem:[#allocation2 + $0x28] sm:$0xff]
    %v133 = vld [vmem:[#allocation2 + $0x30] sm:$0xff]
    %v134 = vld [vmem:[#allocation2 + $0x38] sm:$0xff]
    %v135 = vld [vmem:[#allocation2 + $0x40] sm:$0xff]
    %v136 = vld [vmem:[#allocation2 + $0x48] sm:$0xff]
    %v137 = vld [vmem:[#allocation2 + $0x50] sm:$0xff]
    %v138 = vld [vmem:[#allocation2 + $0x58] sm:$0xff]
    %v139 = vld [vmem:[#allocation2 + $0x60] sm:$0xff]
    %v140 = vld [vmem:[#allocation2 + $0x68] sm:$0xff]
    %v141 = vld [vmem:[#allocation2 + $0x70] sm:$0xff]
    %v142 = vld [vmem:[#allocation2 + $0x78] sm:$0xff]
    %v143 = vld [vmem:[#allocation2 + $0x80] sm:$0xff]
    %v144 = vld [vmem:[#allocation2 + $0x88] sm:$0xff]
    %v145 = vld [vmem:[#allocation2 + $0x90] sm:$0xff]
    %v146 = vld [vmem:[#allocation2 + $0x98] sm:$0xff]
    %v147 = vld [vmem:[#allocation2 + $0xa0] sm:$0xff]
    %v148 = vld [vmem:[#allocation2 + $0xa8] sm:$0xff]
    %v149 = vld [vmem:[#allocation2 + $0xb0] sm:$0xff]
    %v150 = vld [vmem:[#allocation2 + $0xb8] sm:$0xff]
    %v151 = vld [vmem:[#allocation2 + $0xc0] sm:$0xff]
    %v152 = vld [vmem:[#allocation2 + $0xc8] sm:$0xff]
    %v153 = vld [vmem:[#allocation2 + $0xd0] sm:$0xff]
    %v154 = vld [vmem:[#allocation2 + $0xd8] sm:$0xff]
    %v155 = vld [vmem:[#allocation2 + $0xe0] sm:$0xff]
    %v156 = vld [vmem:[#allocation2 + $0xe8] sm:$0xff]
    %v157 = vld [vmem:[#allocation2 + $0xf0] sm:$0xff]
    %v158 = vld [vmem:[#allocation2 + $0xf8] sm:$0xff]
    %v159 = vld [vmem:[#allocation2 + $0x100] sm:$0xff]
    %v160 = vld [vmem:[#allocation2 + $0x108] sm:$0xff]
    %v161 = vld [vmem:[#allocation2 + $0x110] sm:$0xff]
    %v162 = vld [vmem:[#allocation2 + $0x118] sm:$0xff]
    %v163 = vld [vmem:[#allocation2 + $0x120] sm:$0xff]
    %v164 = vld [vmem:[#allocation2 + $0x128] sm:$0xff]
    %v165 = vld [vmem:[#allocation2 + $0x130] sm:$0xff]
    %v166 = vld [vmem:[#allocation2 + $0x138] sm:$0xff]
    %v167 = vld [vmem:[#allocation2 + $0x140] sm:$0xff]
    %v168 = vld [vmem:[#allocation2 + $0x148] sm:$0xff]
    %v169 = vld [vmem:[#allocation2 + $0x150] sm:$0xff]
    %v170 = vld [vmem:[#allocation2 + $0x158] sm:$0xff]
    %v171 = vld [vmem:[#allocation2 + $0x160] sm:$0xff]
    %v172 = vld [vmem:[#allocation2 + $0x168] sm:$0xff]
    %v173 = vld [vmem:[#allocation2 + $0x170] sm:$0xff]
    %v174 = vld [vmem:[#allocation2 + $0x178] sm:$0xff]
    %v175 = vld [vmem:[#allocation2 + $0x180] sm:$0xff]
    %v176 = vld [vmem:[#allocation2 + $0x188] sm:$0xff]
    %v177 = vld [vmem:[#allocation2 + $0x190] sm:$0xff]
    %v178 = vld [vmem:[#allocation2 + $0x198] sm:$0xff]
    %v179 = vld [vmem:[#allocation2 + $0x1a0] sm:$0xff]
    %v180 = vld [vmem:[#allocation2 + $0x1a8] sm:$0xff]
    %v181 = vld [vmem:[#allocation2 + $0x1b0] sm:$0xff]
    %v182 = vld [vmem:[#allocation2 + $0x1b8] sm:$0xff]
    %v183 = vld [vmem:[#allocation2 + $0x1c0] sm:$0xff]
    %v184 = vld [vmem:[#allocation2 + $0x1c8] sm:$0xff]
    %v185 = vld [vmem:[#allocation2 + $0x1d0] sm:$0xff]
    %v186 = vld [vmem:[#allocation2 + $0x1d8] sm:$0xff]
    %v187 = vld [vmem:[#allocation2 + $0x1e0] sm:$0xff]
    %v188 = vld [vmem:[#allocation2 + $0x1e8] sm:$0xff]
    %v189 = vld [vmem:[#allocation2 + $0x1f0] sm:$0xff]
    %v190 = vld [vmem:[#allocation2 + $0x1f8] sm:$0xff]
    %vm195 = vcmask 1041409
    %v196 = vsel %vm195, %v119, %v105
    %v197 = vsel %vm195, %v126, %v112
    %200 = vmatpush.msra.mxu0 %v157
    %201 = vmatpush.msra.mxu0 %v155
    %202 = vmatpush.msra.mxu0 %v153
    %203 = vmatpush.msra.mxu0 %v151
    %204 = vmatpush.msra.mxu0 %v149
    %205 = vmatpush.msra.mxu0 %v147
    %206 = vmatpush.msra.mxu0 %v145
    %207 = vmatpush.msra.mxu0 %v143
    %208 = vmatpush.msra.mxu0 %v141
    %209 = vmatpush.msra.mxu0 %v139
    %210 = vmatpush.msra.mxu0 %v137
    %211 = vmatpush.msra.mxu0 %v135
    %212 = vmatpush.msra.mxu0 %v133
    %213 = vmatpush.msra.mxu0 %v131
    %214 = vmatpush.msra.mxu0 %v129
    %215 = vmatpush.msra.mxu0 %v127
    %216 = vmatmul.f32.gmra.mxu0 %v196
    %v217 = vpop.f32.mrf.mxu0
    %v218 = vadd.f32 0.0, %v217
    %219 = vdwg.mxu0
    %220 = vmatpush.msra.mxu0 %v189
    %221 = vmatpush.msra.mxu0 %v187
    %222 = vmatpush.msra.mxu0 %v185
    %223 = vmatpush.msra.mxu0 %v183
    %224 = vmatpush.msra.mxu0 %v181
    %225 = vmatpush.msra.mxu0 %v179
    %226 = vmatpush.msra.mxu0 %v177
    %227 = vmatpush.msra.mxu0 %v175
    %228 = vmatpush.msra.mxu0 %v173
    %229 = vmatpush.msra.mxu0 %v171
    %230 = vmatpush.msra.mxu0 %v169
    %231 = vmatpush.msra.mxu0 %v167
    %232 = vmatpush.msra.mxu0 %v165
    %233 = vmatpush.msra.mxu0 %v163
    %234 = vmatpush.msra.mxu0 %v161
    %235 = vmatpush.msra.mxu0 %v159
    %236 = vmatmul.f32.gmra.mxu0 %v197
    %v237 = vpop.f32.mrf.mxu0
    %v238 = vadd.f32 %v218, %v237
    %239 = vdwg.mxu0
    %240 = vmatpush.msra.mxu0 %v158
    %241 = vmatpush.msra.mxu0 %v156
    %242 = vmatpush.msra.mxu0 %v154
    %243 = vmatpush.msra.mxu0 %v152
    %244 = vmatpush.msra.mxu0 %v150
    %245 = vmatpush.msra.mxu0 %v148
    %246 = vmatpush.msra.mxu0 %v146
    %247 = vmatpush.msra.mxu0 %v144
    %248 = vmatpush.msra.mxu0 %v142
    %249 = vmatpush.msra.mxu0 %v140
    %250 = vmatpush.msra.mxu0 %v138
    %251 = vmatpush.msra.mxu0 %v136
    %252 = vmatpush.msra.mxu0 %v134
    %253 = vmatpush.msra.mxu0 %v132
    %254 = vmatpush.msra.mxu0 %v130
    %255 = vmatpush.msra.mxu0 %v128
    %256 = vmatmul.f32.gmra.mxu0 %v196
    %v257 = vpop.f32.mrf.mxu0
    %v258 = vadd.f32 0.0, %v257
    %259 = vdwg.mxu0
    %260 = vmatpush.msra.mxu0 %v190
    %261 = vmatpush.msra.mxu0 %v188
    %262 = vmatpush.msra.mxu0 %v186
    %263 = vmatpush.msra.mxu0 %v184
    %264 = vmatpush.msra.mxu0 %v182
    %265 = vmatpush.msra.mxu0 %v180
    %266 = vmatpush.msra.mxu0 %v178
    %267 = vmatpush.msra.mxu0 %v176
    %268 = vmatpush.msra.mxu0 %v174
    %269 = vmatpush.msra.mxu0 %v172
    %270 = vmatpush.msra.mxu0 %v170
    %271 = vmatpush.msra.mxu0 %v168
    %272 = vmatpush.msra.mxu0 %v166
    %273 = vmatpush.msra.mxu0 %v164
    %274 = vmatpush.msra.mxu0 %v162
    %275 = vmatpush.msra.mxu0 %v160
    %276 = vmatmul.f32.gmra.mxu0 %v197
    %v277 = vpop.f32.mrf.mxu0
    %v278 = vadd.f32 %v258, %v277
    %279 = vdwg.mxu0
    %v280 = vand.u32 2147483647, %v238
    %v281 = vand.u32 2147483647, %v278
    %v282 = vmin.f32 %v280, %v281
    %v283 = vmax.f32 %v280, %v281
    %v284 = vrcp.pop %v283
    %v285 = vmul.f32 %v283, %v284
    %v286 = vsub.f32 1.0, %v285
    %v287 = vmul.f32 %v284, %v286
    %v288 = vadd.f32 %v284, %v287
    %vm289 = vweird.f32 %v283
    %vm290 = vweird.f32 %v284
    %vm291 = vmor %vm289, %vm290
    %v292 = vsel %vm291, %v284, %v288
    %v293 = vand.u32 2147483647, %v283
    %vm294 = vcmp.eq.f32.partialorder %v293, 8.507059e+37
    %v295 = vand.u32 %v283, 2147483648
    %v296 = vor.u32 1.1754944e-38, %v295
    %v297 = vsel %vm294, %v296, %v292
    %v298 = vmul.f32 %v282, %v297
    %v299 = vmul.f32 %v298, %v298
    %v300 = vmul.f32 0.002785687, %v299
    %v301 = vadd.f32 %v300, -0.015866
    %v302 = vmul.f32 %v301, %v299
    %v303 = vadd.f32 %v302, 0.04247222
    %v304 = vmul.f32 %v303, %v299
    %v305 = vadd.f32 %v304, -0.074975304
    %v306 = vmul.f32 %v305, %v299
    %v307 = vadd.f32 %v306, 0.1064488
    %v308 = vmul.f32 %v307, %v299
    %v309 = vadd.f32 %v308, -0.14207031
    %v310 = vmul.f32 %v309, %v299
    %v311 = vadd.f32 %v310, 0.19993454
    %v312 = vmul.f32 %v311, %v299
    %v313 = vadd.f32 %v312, -0.33333147
    %v314 = vmul.f32 %v313, %v299
    %v315 = vmul.f32 %v314, %v298
    %v316 = vadd.f32 %v315, %v298
    %vm317 = vcmp.gt.f32.partialorder %v281, %v280
    %v318 = vsub.f32 1.5707964, %v316
    %v319 = vsel %vm317, %v318, %v316
    %vm320 = vcmp.lt.f32.partialorder %v238, 0.0
    %v321 = vsub.f32 3.1415927, %v319
    %v322 = vsel %vm320, %v321, %v319
    %vm323 = vcmp.lt.s32.totalorder %v238, 0
    %v324 = vsel %vm323, 3.1415927, 0.0
    %vm325 = vcmp.eq.f32.partialorder %v278, 0.0
    %v326 = vsel %vm325, %v324, %v322
    %vm327 = vcmp.ne.f32.partialorder %v238, %v238
    %vm328 = vcmp.ne.f32.partialorder %v278, %v278
    %vm329 = vmor %vm327, %vm328
    %v330 = vsel %vm329, nan, %v326
    %vm331 = vcmp.lt.f32.partialorder %v238, 0.0
    %v332 = vsel %vm331, 2.3561945, 0.7853982
    %vm333 = vcmp.eq.s32.totalorder %v280, inf
    %vm334 = vcmp.eq.s32.totalorder %v281, inf
    %vm335 = vmand %vm333, %vm334
    %v336 = vsel %vm335, %v332, %v330
    %v337 = vand.u32 2147483647, %v336
    %v338 = vand.u32 %v278, 2147483648
    %v339 = vor.u32 %v337, %v338
    %v340 = vld [vmem:[%s2] sm:$0xf]
    %v341 = vld [vmem:[#allocation5] sm:$0xff]
    %v342 = vld [vmem:[#allocation5 + $0x8] sm:$0xff]
    %v343 = vld [vmem:[#allocation5 + $0x10] sm:$0xff]
    %v344 = vld [vmem:[#allocation5 + $0x18] sm:$0xff]
    %v345 = vld [vmem:[#allocation5 + $0x20] sm:$0xff]
    %v346 = vld [vmem:[#allocation5 + $0x28] sm:$0xff]
    %v347 = vld [vmem:[#allocation5 + $0x30] sm:$0xff]
    %v348 = vld [vmem:[#allocation5 + $0x38] sm:$0xff]
    %v349 = vld [vmem:[#allocation5 + $0x40] sm:$0xff]
    %v350 = vld [vmem:[#allocation5 + $0x48] sm:$0xff]
    %v351 = vld [vmem:[#allocation5 + $0x50] sm:$0xff]
    %v352 = vld [vmem:[#allocation5 + $0x58] sm:$0xff]
    %v353 = vld [vmem:[#allocation5 + $0x60] sm:$0xff]
    %v354 = vld [vmem:[#allocation5 + $0x68] sm:$0xff]
    %v355 = vld [vmem:[#allocation5 + $0x70] sm:$0xff]
    %v356 = vld [vmem:[#allocation5 + $0x78] sm:$0xff]
    %v357 = vld [vmem:[#allocation5 + $0x80] sm:$0xff]
    %v358 = vld [vmem:[#allocation5 + $0x88] sm:$0xff]
    %v359 = vld [vmem:[#allocation5 + $0x90] sm:$0xff]
    %v360 = vld [vmem:[#allocation5 + $0x98] sm:$0xff]
    %v361 = vld [vmem:[#allocation5 + $0xa0] sm:$0xff]
    %v362 = vld [vmem:[#allocation5 + $0xa8] sm:$0xff]
    %v363 = vld [vmem:[#allocation5 + $0xb0] sm:$0xff]
    %v364 = vld [vmem:[#allocation5 + $0xb8] sm:$0xff]
    %v365 = vld [vmem:[#allocation5 + $0xc0] sm:$0xff]
    %v366 = vld [vmem:[#allocation5 + $0xc8] sm:$0xff]
    %v367 = vld [vmem:[#allocation5 + $0xd0] sm:$0xff]
    %v368 = vld [vmem:[#allocation5 + $0xd8] sm:$0xff]
    %v369 = vld [vmem:[#allocation5 + $0xe0] sm:$0xff]
    %v370 = vld [vmem:[#allocation5 + $0xe8] sm:$0xff]
    %v371 = vld [vmem:[#allocation5 + $0xf0] sm:$0xff]
    %v372 = vld [vmem:[#allocation5 + $0xf8] sm:$0xff]
    %v373 = vld [vmem:[#allocation5 + $0x100] sm:$0xff]
    %v374 = vld [vmem:[#allocation5 + $0x108] sm:$0xff]
    %v375 = vld [vmem:[#allocation5 + $0x110] sm:$0xff]
    %v376 = vld [vmem:[#allocation5 + $0x118] sm:$0xff]
    %v377 = vld [vmem:[#allocation5 + $0x120] sm:$0xff]
    %v378 = vld [vmem:[#allocation5 + $0x128] sm:$0xff]
    %v379 = vld [vmem:[#allocation5 + $0x130] sm:$0xff]
    %v380 = vld [vmem:[#allocation5 + $0x138] sm:$0xff]
    %v381 = vld [vmem:[#allocation5 + $0x140] sm:$0xff]
    %v382 = vld [vmem:[#allocation5 + $0x148] sm:$0xff]
    %v383 = vld [vmem:[#allocation5 + $0x150] sm:$0xff]
    %v384 = vld [vmem:[#allocation5 + $0x158] sm:$0xff]
    %v385 = vld [vmem:[#allocation5 + $0x160] sm:$0xff]
    %v386 = vld [vmem:[#allocation5 + $0x168] sm:$0xff]
    %v387 = vld [vmem:[#allocation5 + $0x170] sm:$0xff]
    %v388 = vld [vmem:[#allocation5 + $0x178] sm:$0xff]
    %v389 = vld [vmem:[#allocation5 + $0x180] sm:$0xff]
    %v390 = vld [vmem:[#allocation5 + $0x188] sm:$0xff]
    %v391 = vld [vmem:[#allocation5 + $0x190] sm:$0xff]
    %v392 = vld [vmem:[#allocation5 + $0x198] sm:$0xff]
    %v393 = vld [vmem:[#allocation5 + $0x1a0] sm:$0xff]
    %v394 = vld [vmem:[#allocation5 + $0x1a8] sm:$0xff]
    %v395 = vld [vmem:[#allocation5 + $0x1b0] sm:$0xff]
    %v396 = vld [vmem:[#allocation5 + $0x1b8] sm:$0xff]
    %v397 = vld [vmem:[#allocation5 + $0x1c0] sm:$0xff]
    %v398 = vld [vmem:[#allocation5 + $0x1c8] sm:$0xff]
    %v399 = vld [vmem:[#allocation5 + $0x1d0] sm:$0xff]
    %v400 = vld [vmem:[#allocation5 + $0x1d8] sm:$0xff]
    %v401 = vld [vmem:[#allocation5 + $0x1e0] sm:$0xff]
    %v402 = vld [vmem:[#allocation5 + $0x1e8] sm:$0xff]
    %v403 = vld [vmem:[#allocation5 + $0x1f0] sm:$0xff]
    %v404 = vld [vmem:[#allocation5 + $0x1f8] sm:$0xff]
    %v405 = vld [vmem:[%s3] sm:$0xf]
    %v406 = vld [vmem:[#allocation7] sm:$0xff]
    %v407 = vld [vmem:[#allocation7 + $0x8] sm:$0xff]
    %v408 = vld [vmem:[#allocation7 + $0x10] sm:$0xff]
    %v409 = vld [vmem:[#allocation7 + $0x18] sm:$0xff]
    %v410 = vld [vmem:[#allocation7 + $0x20] sm:$0xff]
    %v411 = vld [vmem:[#allocation7 + $0x28] sm:$0xff]
    %v412 = vld [vmem:[#allocation7 + $0x30] sm:$0xff]
    %v413 = vld [vmem:[#allocation7 + $0x38] sm:$0xff]
    %v414 = vld [vmem:[#allocation7 + $0x40] sm:$0xff]
    %v415 = vld [vmem:[#allocation7 + $0x48] sm:$0xff]
    %v416 = vld [vmem:[#allocation7 + $0x50] sm:$0xff]
    %v417 = vld [vmem:[#allocation7 + $0x58] sm:$0xff]
    %v418 = vld [vmem:[#allocation7 + $0x60] sm:$0xff]
    %v419 = vld [vmem:[#allocation7 + $0x68] sm:$0xff]
    %v420 = vld [vmem:[#allocation7 + $0x70] sm:$0xff]
    %v421 = vld [vmem:[#allocation7 + $0x78] sm:$0xff]
    %v422 = vld [vmem:[#allocation7 + $0x80] sm:$0xff]
    %v423 = vld [vmem:[#allocation7 + $0x88] sm:$0xff]
    %v424 = vld [vmem:[#allocation7 + $0x90] sm:$0xff]
    %v425 = vld [vmem:[#allocation7 + $0x98] sm:$0xff]
    %v426 = vld [vmem:[#allocation7 + $0xa0] sm:$0xff]
    %v427 = vld [vmem:[#allocation7 + $0xa8] sm:$0xff]
    %v428 = vld [vmem:[#allocation7 + $0xb0] sm:$0xff]
    %v429 = vld [vmem:[#allocation7 + $0xb8] sm:$0xff]
    %v430 = vld [vmem:[#allocation7 + $0xc0] sm:$0xff]
    %v431 = vld [vmem:[#allocation7 + $0xc8] sm:$0xff]
    %v432 = vld [vmem:[#allocation7 + $0xd0] sm:$0xff]
    %v433 = vld [vmem:[#allocation7 + $0xd8] sm:$0xff]
    %v434 = vld [vmem:[#allocation7 + $0xe0] sm:$0xff]
    %v435 = vld [vmem:[#allocation7 + $0xe8] sm:$0xff]
    %v436 = vld [vmem:[#allocation7 + $0xf0] sm:$0xff]
    %v437 = vld [vmem:[#allocation7 + $0xf8] sm:$0xff]
    %v438 = vld [vmem:[#allocation7 + $0x100] sm:$0xff]
    %v439 = vld [vmem:[#allocation7 + $0x108] sm:$0xff]
    %v440 = vld [vmem:[#allocation7 + $0x110] sm:$0xff]
    %v441 = vld [vmem:[#allocation7 + $0x118] sm:$0xff]
    %v442 = vld [vmem:[#allocation7 + $0x120] sm:$0xff]
    %v443 = vld [vmem:[#allocation7 + $0x128] sm:$0xff]
    %v444 = vld [vmem:[#allocation7 + $0x130] sm:$0xff]
    %v445 = vld [vmem:[#allocation7 + $0x138] sm:$0xff]
    %v446 = vld [vmem:[#allocation7 + $0x140] sm:$0xff]
    %v447 = vld [vmem:[#allocation7 + $0x148] sm:$0xff]
    %v448 = vld [vmem:[#allocation7 + $0x150] sm:$0xff]
    %v449 = vld [vmem:[#allocation7 + $0x158] sm:$0xff]
    %v450 = vld [vmem:[#allocation7 + $0x160] sm:$0xff]
    %v451 = vld [vmem:[#allocation7 + $0x168] sm:$0xff]
    %v452 = vld [vmem:[#allocation7 + $0x170] sm:$0xff]
    %v453 = vld [vmem:[#allocation7 + $0x178] sm:$0xff]
    %v454 = vld [vmem:[#allocation7 + $0x180] sm:$0xff]
    %v455 = vld [vmem:[#allocation7 + $0x188] sm:$0xff]
    %v456 = vld [vmem:[#allocation7 + $0x190] sm:$0xff]
    %v457 = vld [vmem:[#allocation7 + $0x198] sm:$0xff]
    %v458 = vld [vmem:[#allocation7 + $0x1a0] sm:$0xff]
    %v459 = vld [vmem:[#allocation7 + $0x1a8] sm:$0xff]
    %v460 = vld [vmem:[#allocation7 + $0x1b0] sm:$0xff]
    %v461 = vld [vmem:[#allocation7 + $0x1b8] sm:$0xff]
    %v462 = vld [vmem:[#allocation7 + $0x1c0] sm:$0xff]
    %v463 = vld [vmem:[#allocation7 + $0x1c8] sm:$0xff]
    %v464 = vld [vmem:[#allocation7 + $0x1d0] sm:$0xff]
    %v465 = vld [vmem:[#allocation7 + $0x1d8] sm:$0xff]
    %v466 = vld [vmem:[#allocation7 + $0x1e0] sm:$0xff]
    %v467 = vld [vmem:[#allocation7 + $0x1e8] sm:$0xff]
    %v468 = vld [vmem:[#allocation7 + $0x1f0] sm:$0xff]
    %v469 = vld [vmem:[#allocation7 + $0x1f8] sm:$0xff]
    %471 = vst [vmem:[#allocation1] ss:$9 sm:$0xff] %v405
    %v472 = vld [vmem:[#allocation1] sm:$0xff]
    %v473 = vld [vmem:[#allocation1 + $0x9] sm:$0xff]
    %v474 = vld [vmem:[#allocation1 + $0x12] sm:$0xff]
    %v475 = vld [vmem:[#allocation1 + $0x1b] sm:$0xff]
    %v544 = vunpack.c.l.b16 %v406
    %v545 = vunpack.c.h.b16 %v406
    %v546 = vunpack.c.l.b16 %v407
    %v547 = vunpack.c.h.b16 %v407
    %v548 = vunpack.c.l.b16 %v408
    %v549 = vunpack.c.h.b16 %v408
    %v550 = vunpack.c.l.b16 %v409
    %v551 = vunpack.c.h.b16 %v409
    %v552 = vunpack.c.l.b16 %v410
    %v553 = vunpack.c.h.b16 %v410
    %v554 = vunpack.c.l.b16 %v411
    %v555 = vunpack.c.h.b16 %v411
    %v556 = vunpack.c.l.b16 %v412
    %v557 = vunpack.c.h.b16 %v412
    %v558 = vunpack.c.l.b16 %v413
    %v559 = vunpack.c.h.b16 %v413
    %v560 = vunpack.c.l.b16 %v414
    %v561 = vunpack.c.h.b16 %v414
    %v562 = vunpack.c.l.b16 %v415
    %v563 = vunpack.c.h.b16 %v415
    %v564 = vunpack.c.l.b16 %v416
    %v565 = vunpack.c.h.b16 %v416
    %v566 = vunpack.c.l.b16 %v417
    %v567 = vunpack.c.h.b16 %v417
    %v568 = vunpack.c.l.b16 %v418
    %v569 = vunpack.c.h.b16 %v418
    %v570 = vunpack.c.l.b16 %v419
    %v571 = vunpack.c.h.b16 %v419
    %v572 = vunpack.c.l.b16 %v420
    %v573 = vunpack.c.h.b16 %v420
    %v574 = vunpack.c.l.b16 %v421
    %v575 = vunpack.c.h.b16 %v421
    %v576 = vunpack.c.l.b16 %v422
    %v577 = vunpack.c.h.b16 %v422
    %v578 = vunpack.c.l.b16 %v423
    %v579 = vunpack.c.h.b16 %v423
    %v580 = vunpack.c.l.b16 %v424
    %v581 = vunpack.c.h.b16 %v424
    %v582 = vunpack.c.l.b16 %v425
    %v583 = vunpack.c.h.b16 %v425
    %v584 = vunpack.c.l.b16 %v426
    %v585 = vunpack.c.h.b16 %v426
    %v586 = vunpack.c.l.b16 %v427
    %v587 = vunpack.c.h.b16 %v427
    %v588 = vunpack.c.l.b16 %v428
    %v589 = vunpack.c.h.b16 %v428
    %v590 = vunpack.c.l.b16 %v429
    %v591 = vunpack.c.h.b16 %v429
    %v592 = vunpack.c.l.b16 %v430
    %v593 = vunpack.c.h.b16 %v430
    %v594 = vunpack.c.l.b16 %v431
    %v595 = vunpack.c.h.b16 %v431
    %v596 = vunpack.c.l.b16 %v432
    %v597 = vunpack.c.h.b16 %v432
    %v598 = vunpack.c.l.b16 %v433
    %v599 = vunpack.c.h.b16 %v433
    %v600 = vunpack.c.l.b16 %v434
    %v601 = vunpack.c.h.b16 %v434
    %v602 = vunpack.c.l.b16 %v435
    %v603 = vunpack.c.h.b16 %v435
    %v604 = vunpack.c.l.b16 %v436
    %v605 = vunpack.c.h.b16 %v436
    %v606 = vunpack.c.l.b16 %v437
    %v607 = vunpack.c.h.b16 %v437
    %v608 = vunpack.c.l.b16 %v438
    %v609 = vunpack.c.h.b16 %v438
    %v610 = vunpack.c.l.b16 %v439
    %v611 = vunpack.c.h.b16 %v439
    %v612 = vunpack.c.l.b16 %v440
    %v613 = vunpack.c.h.b16 %v440
    %v614 = vunpack.c.l.b16 %v441
    %v615 = vunpack.c.h.b16 %v441
    %v616 = vunpack.c.l.b16 %v442
    %v617 = vunpack.c.h.b16 %v442
    %v618 = vunpack.c.l.b16 %v443
    %v619 = vunpack.c.h.b16 %v443
    %v620 = vunpack.c.l.b16 %v444
    %v621 = vunpack.c.h.b16 %v444
    %v622 = vunpack.c.l.b16 %v445
    %v623 = vunpack.c.h.b16 %v445
    %v624 = vunpack.c.l.b16 %v446
    %v625 = vunpack.c.h.b16 %v446
    %v626 = vunpack.c.l.b16 %v447
    %v627 = vunpack.c.h.b16 %v447
    %v628 = vunpack.c.l.b16 %v448
    %v629 = vunpack.c.h.b16 %v448
    %v630 = vunpack.c.l.b16 %v449
    %v631 = vunpack.c.h.b16 %v449
    %v632 = vunpack.c.l.b16 %v450
    %v633 = vunpack.c.h.b16 %v450
    %v634 = vunpack.c.l.b16 %v451
    %v635 = vunpack.c.h.b16 %v451
    %v636 = vunpack.c.l.b16 %v452
    %v637 = vunpack.c.h.b16 %v452
    %v638 = vunpack.c.l.b16 %v453
    %v639 = vunpack.c.h.b16 %v453
    %v640 = vunpack.c.l.b16 %v454
    %v641 = vunpack.c.h.b16 %v454
    %v642 = vunpack.c.l.b16 %v455
    %v643 = vunpack.c.h.b16 %v455
    %v644 = vunpack.c.l.b16 %v456
    %v645 = vunpack.c.h.b16 %v456
    %v646 = vunpack.c.l.b16 %v457
    %v647 = vunpack.c.h.b16 %v457
    %v648 = vunpack.c.l.b16 %v458
    %v649 = vunpack.c.h.b16 %v458
    %v650 = vunpack.c.l.b16 %v459
    %v651 = vunpack.c.h.b16 %v459
    %v652 = vunpack.c.l.b16 %v460
    %v653 = vunpack.c.h.b16 %v460
    %v654 = vunpack.c.l.b16 %v461
    %v655 = vunpack.c.h.b16 %v461
    %v656 = vunpack.c.l.b16 %v462
    %v657 = vunpack.c.h.b16 %v462
    %v658 = vunpack.c.l.b16 %v463
    %v659 = vunpack.c.h.b16 %v463
    %v660 = vunpack.c.l.b16 %v464
    %v661 = vunpack.c.h.b16 %v464
    %v662 = vunpack.c.l.b16 %v465
    %v663 = vunpack.c.h.b16 %v465
    %v664 = vunpack.c.l.b16 %v466
    %v665 = vunpack.c.h.b16 %v466
    %v666 = vunpack.c.l.b16 %v467
    %v667 = vunpack.c.h.b16 %v467
    %v668 = vunpack.c.l.b16 %v468
    %v669 = vunpack.c.h.b16 %v468
    %v670 = vunpack.c.l.b16 %v469
    %v671 = vunpack.c.h.b16 %v469
    %v672 = vpack.c.b16 %v546, %v544
    %v673 = vpack.c.b16 %v547, %v545
    %v674 = vpack.c.b16 %v550, %v548
    %v675 = vpack.c.b16 %v551, %v549
    %v676 = vpack.c.b16 %v554, %v552
    %v677 = vpack.c.b16 %v555, %v553
    %v678 = vpack.c.b16 %v558, %v556
    %v679 = vpack.c.b16 %v559, %v557
    %v680 = vpack.c.b16 %v562, %v560
    %v681 = vpack.c.b16 %v563, %v561
    %v682 = vpack.c.b16 %v566, %v564
    %v683 = vpack.c.b16 %v567, %v565
    %v684 = vpack.c.b16 %v570, %v568
    %v685 = vpack.c.b16 %v571, %v569
    %v686 = vpack.c.b16 %v574, %v572
    %v687 = vpack.c.b16 %v575, %v573
    %v688 = vpack.c.b16 %v578, %v576
    %v689 = vpack.c.b16 %v579, %v577
    %v690 = vpack.c.b16 %v582, %v580
    %v691 = vpack.c.b16 %v583, %v581
    %v692 = vpack.c.b16 %v586, %v584
    %v693 = vpack.c.b16 %v587, %v585
    %v694 = vpack.c.b16 %v590, %v588
    %v695 = vpack.c.b16 %v591, %v589
    %v696 = vpack.c.b16 %v594, %v592
    %v697 = vpack.c.b16 %v595, %v593
    %v698 = vpack.c.b16 %v598, %v596
    %v699 = vpack.c.b16 %v599, %v597
    %v700 = vpack.c.b16 %v602, %v600
    %v701 = vpack.c.b16 %v603, %v601
    %v702 = vpack.c.b16 %v606, %v604
    %v703 = vpack.c.b16 %v607, %v605
    %v704 = vpack.c.b16 %v610, %v608
    %v705 = vpack.c.b16 %v611, %v609
    %v706 = vpack.c.b16 %v614, %v612
    %v707 = vpack.c.b16 %v615, %v613
    %v708 = vpack.c.b16 %v618, %v616
    %v709 = vpack.c.b16 %v619, %v617
    %v710 = vpack.c.b16 %v622, %v620
    %v711 = vpack.c.b16 %v623, %v621
    %v712 = vpack.c.b16 %v626, %v624
    %v713 = vpack.c.b16 %v627, %v625
    %v714 = vpack.c.b16 %v630, %v628
    %v715 = vpack.c.b16 %v631, %v629
    %v716 = vpack.c.b16 %v634, %v632
    %v717 = vpack.c.b16 %v635, %v633
    %v718 = vpack.c.b16 %v638, %v636
    %v719 = vpack.c.b16 %v639, %v637
    %v720 = vpack.c.b16 %v642, %v640
    %v721 = vpack.c.b16 %v643, %v641
    %v722 = vpack.c.b16 %v646, %v644
    %v723 = vpack.c.b16 %v647, %v645
    %v724 = vpack.c.b16 %v650, %v648
    %v725 = vpack.c.b16 %v651, %v649
    %v726 = vpack.c.b16 %v654, %v652
    %v727 = vpack.c.b16 %v655, %v653
    %v728 = vpack.c.b16 %v658, %v656
    %v729 = vpack.c.b16 %v659, %v657
    %v730 = vpack.c.b16 %v662, %v660
    %v731 = vpack.c.b16 %v663, %v661
    %v732 = vpack.c.b16 %v666, %v664
    %v733 = vpack.c.b16 %v667, %v665
    %v734 = vpack.c.b16 %v670, %v668
    %v735 = vpack.c.b16 %v671, %v669
    %800 = vmatpush.bf16.msra.mxu0 %v686
    %801 = vmatpush.bf16.msra.mxu0 %v684
    %802 = vmatpush.bf16.msra.mxu0 %v682
    %803 = vmatpush.bf16.msra.mxu0 %v680
    %804 = vmatpush.bf16.msra.mxu0 %v678
    %805 = vmatpush.bf16.msra.mxu0 %v676
    %806 = vmatpush.bf16.msra.mxu0 %v674
    %807 = vmatpush.bf16.msra.mxu0 %v672
    %808 = vmatmul.bf16.gmra.mxu0 %v472
    %v809 = vpop.f32.mrf.mxu0
    %v810 = vadd.f32 0.0, %v809
    %v811 = vpop.f32.mrf.mxu0
    %812 = vdwg.mxu0
    %813 = vmatpush.bf16.msra.mxu0 %v702
    %814 = vmatpush.bf16.msra.mxu0 %v700
    %815 = vmatpush.bf16.msra.mxu0 %v698
    %816 = vmatpush.bf16.msra.mxu0 %v696
    %817 = vmatpush.bf16.msra.mxu0 %v694
    %818 = vmatpush.bf16.msra.mxu0 %v692
    %819 = vmatpush.bf16.msra.mxu0 %v690
    %820 = vmatpush.bf16.msra.mxu0 %v688
    %821 = vmatmul.bf16.gmra.mxu0 %v473
    %v822 = vpop.f32.mrf.mxu0
    %v823 = vadd.f32 %v810, %v822
    %v824 = vpop.f32.mrf.mxu0
    %825 = vdwg.mxu0
    %826 = vmatpush.bf16.msra.mxu0 %v718
    %827 = vmatpush.bf16.msra.mxu0 %v716
    %828 = vmatpush.bf16.msra.mxu0 %v714
    %829 = vmatpush.bf16.msra.mxu0 %v712
    %830 = vmatpush.bf16.msra.mxu0 %v710
    %831 = vmatpush.bf16.msra.mxu0 %v708
    %832 = vmatpush.bf16.msra.mxu0 %v706
    %833 = vmatpush.bf16.msra.mxu0 %v704
    %834 = vmatmul.bf16.gmra.mxu0 %v474
    %v835 = vpop.f32.mrf.mxu0
    %v836 = vadd.f32 %v823, %v835
    %v837 = vpop.f32.mrf.mxu0
    %838 = vdwg.mxu0
    %839 = vmatpush.bf16.msra.mxu0 %v734
    %840 = vmatpush.bf16.msra.mxu0 %v732
    %841 = vmatpush.bf16.msra.mxu0 %v730
    %842 = vmatpush.bf16.msra.mxu0 %v728
    %843 = vmatpush.bf16.msra.mxu0 %v726
    %844 = vmatpush.bf16.msra.mxu0 %v724
    %845 = vmatpush.bf16.msra.mxu0 %v722
    %846 = vmatpush.bf16.msra.mxu0 %v720
    %847 = vmatmul.bf16.gmra.mxu0 %v475
    %v848 = vpop.f32.mrf.mxu0
    %v849 = vadd.f32 %v836, %v848
    %v850 = vpop.f32.mrf.mxu0
    %851 = vdwg.mxu0
    %852 = vmatpush.bf16.msra.mxu0 %v687
    %853 = vmatpush.bf16.msra.mxu0 %v685
    %854 = vmatpush.bf16.msra.mxu0 %v683
    %855 = vmatpush.bf16.msra.mxu0 %v681
    %856 = vmatpush.bf16.msra.mxu0 %v679
    %857 = vmatpush.bf16.msra.mxu0 %v677
    %858 = vmatpush.bf16.msra.mxu0 %v675
    %859 = vmatpush.bf16.msra.mxu0 %v673
    %860 = vmatmul.bf16.gmra.mxu0 %v472
    %v861 = vpop.f32.mrf.mxu0
    %v862 = vadd.f32 0.0, %v861
    %v863 = vpop.f32.mrf.mxu0
    %864 = vdwg.mxu0
    %865 = vmatpush.bf16.msra.mxu0 %v703
    %866 = vmatpush.bf16.msra.mxu0 %v701
    %867 = vmatpush.bf16.msra.mxu0 %v699
    %868 = vmatpush.bf16.msra.mxu0 %v697
    %869 = vmatpush.bf16.msra.mxu0 %v695
    %870 = vmatpush.bf16.msra.mxu0 %v693
    %871 = vmatpush.bf16.msra.mxu0 %v691
    %872 = vmatpush.bf16.msra.mxu0 %v689
    %873 = vmatmul.bf16.gmra.mxu0 %v473
    %v874 = vpop.f32.mrf.mxu0
    %v875 = vadd.f32 %v862, %v874
    %v876 = vpop.f32.mrf.mxu0
    %877 = vdwg.mxu0
    %878 = vmatpush.bf16.msra.mxu0 %v719
    %879 = vmatpush.bf16.msra.mxu0 %v717
    %880 = vmatpush.bf16.msra.mxu0 %v715
    %881 = vmatpush.bf16.msra.mxu0 %v713
    %882 = vmatpush.bf16.msra.mxu0 %v711
    %883 = vmatpush.bf16.msra.mxu0 %v709
    %884 = vmatpush.bf16.msra.mxu0 %v707
    %885 = vmatpush.bf16.msra.mxu0 %v705
    %886 = vmatmul.bf16.gmra.mxu0 %v474
    %v887 = vpop.f32.mrf.mxu0
    %v888 = vadd.f32 %v875, %v887
    %v889 = vpop.f32.mrf.mxu0
    %890 = vdwg.mxu0
    %891 = vmatpush.bf16.msra.mxu0 %v735
    %892 = vmatpush.bf16.msra.mxu0 %v733
    %893 = vmatpush.bf16.msra.mxu0 %v731
    %894 = vmatpush.bf16.msra.mxu0 %v729
    %895 = vmatpush.bf16.msra.mxu0 %v727
    %896 = vmatpush.bf16.msra.mxu0 %v725
    %897 = vmatpush.bf16.msra.mxu0 %v723
    %898 = vmatpush.bf16.msra.mxu0 %v721
    %899 = vmatmul.bf16.gmra.mxu0 %v475
    %v900 = vpop.f32.mrf.mxu0
    %v901 = vadd.f32 %v888, %v900
    %v902 = vpop.f32.mrf.mxu0
    %903 = vdwg.mxu0
    %905 = vst [vmem:[#allocation1] ss:$9 sm:$0xff] %v340
    %v906 = vld [vmem:[#allocation1] sm:$0xff]
    %v907 = vld [vmem:[#allocation1 + $0x9] sm:$0xff]
    %v908 = vld [vmem:[#allocation1 + $0x12] sm:$0xff]
    %v909 = vld [vmem:[#allocation1 + $0x1b] sm:$0xff]
    %v978 = vunpack.c.l.b16 %v341
    %v979 = vunpack.c.h.b16 %v341
    %v980 = vunpack.c.l.b16 %v342
    %v981 = vunpack.c.h.b16 %v342
    %v982 = vunpack.c.l.b16 %v343
    %v983 = vunpack.c.h.b16 %v343
    %v984 = vunpack.c.l.b16 %v344
    %v985 = vunpack.c.h.b16 %v344
    %v986 = vunpack.c.l.b16 %v345
    %v987 = vunpack.c.h.b16 %v345
    %v988 = vunpack.c.l.b16 %v346
    %v989 = vunpack.c.h.b16 %v346
    %v990 = vunpack.c.l.b16 %v347
    %v991 = vunpack.c.h.b16 %v347
    %v992 = vunpack.c.l.b16 %v348
    %v993 = vunpack.c.h.b16 %v348
    %v994 = vunpack.c.l.b16 %v349
    %v995 = vunpack.c.h.b16 %v349
    %v996 = vunpack.c.l.b16 %v350
    %v997 = vunpack.c.h.b16 %v350
    %v998 = vunpack.c.l.b16 %v351
    %v999 = vunpack.c.h.b16 %v351
    %v1000 = vunpack.c.l.b16 %v352
    %v1001 = vunpack.c.h.b16 %v352
    %v1002 = vunpack.c.l.b16 %v353
    %v1003 = vunpack.c.h.b16 %v353
    %v1004 = vunpack.c.l.b16 %v354
    %v1005 = vunpack.c.h.b16 %v354
    %v1006 = vunpack.c.l.b16 %v355
    %v1007 = vunpack.c.h.b16 %v355
    %v1008 = vunpack.c.l.b16 %v356
    %v1009 = vunpack.c.h.b16 %v356
    %v1010 = vunpack.c.l.b16 %v357
    %v1011 = vunpack.c.h.b16 %v357
    %v1012 = vunpack.c.l.b16 %v358
    %v1013 = vunpack.c.h.b16 %v358
    %v1014 = vunpack.c.l.b16 %v359
    %v1015 = vunpack.c.h.b16 %v359
    %v1016 = vunpack.c.l.b16 %v360
    %v1017 = vunpack.c.h.b16 %v360
    %v1018 = vunpack.c.l.b16 %v361
    %v1019 = vunpack.c.h.b16 %v361
    %v1020 = vunpack.c.l.b16 %v362
    %v1021 = vunpack.c.h.b16 %v362
    %v1022 = vunpack.c.l.b16 %v363
    %v1023 = vunpack.c.h.b16 %v363
    %v1024 = vunpack.c.l.b16 %v364
    %v1025 = vunpack.c.h.b16 %v364
    %v1026 = vunpack.c.l.b16 %v365
    %v1027 = vunpack.c.h.b16 %v365
    %v1028 = vunpack.c.l.b16 %v366
    %v1029 = vunpack.c.h.b16 %v366
    %v1030 = vunpack.c.l.b16 %v367
    %v1031 = vunpack.c.h.b16 %v367
    %v1032 = vunpack.c.l.b16 %v368
    %v1033 = vunpack.c.h.b16 %v368
    %v1034 = vunpack.c.l.b16 %v369
    %v1035 = vunpack.c.h.b16 %v369
    %v1036 = vunpack.c.l.b16 %v370
    %v1037 = vunpack.c.h.b16 %v370
    %v1038 = vunpack.c.l.b16 %v371
    %v1039 = vunpack.c.h.b16 %v371
    %v1040 = vunpack.c.l.b16 %v372
    %v1041 = vunpack.c.h.b16 %v372
    %v1042 = vunpack.c.l.b16 %v373
    %v1043 = vunpack.c.h.b16 %v373
    %v1044 = vunpack.c.l.b16 %v374
    %v1045 = vunpack.c.h.b16 %v374
    %v1046 = vunpack.c.l.b16 %v375
    %v1047 = vunpack.c.h.b16 %v375
    %v1048 = vunpack.c.l.b16 %v376
    %v1049 = vunpack.c.h.b16 %v376
    %v1050 = vunpack.c.l.b16 %v377
    %v1051 = vunpack.c.h.b16 %v377
    %v1052 = vunpack.c.l.b16 %v378
    %v1053 = vunpack.c.h.b16 %v378
    %v1054 = vunpack.c.l.b16 %v379
    %v1055 = vunpack.c.h.b16 %v379
    %v1056 = vunpack.c.l.b16 %v380
    %v1057 = vunpack.c.h.b16 %v380
    %v1058 = vunpack.c.l.b16 %v381
    %v1059 = vunpack.c.h.b16 %v381
    %v1060 = vunpack.c.l.b16 %v382
    %v1061 = vunpack.c.h.b16 %v382
    %v1062 = vunpack.c.l.b16 %v383
    %v1063 = vunpack.c.h.b16 %v383
    %v1064 = vunpack.c.l.b16 %v384
    %v1065 = vunpack.c.h.b16 %v384
    %v1066 = vunpack.c.l.b16 %v385
    %v1067 = vunpack.c.h.b16 %v385
    %v1068 = vunpack.c.l.b16 %v386
    %v1069 = vunpack.c.h.b16 %v386
    %v1070 = vunpack.c.l.b16 %v387
    %v1071 = vunpack.c.h.b16 %v387
    %v1072 = vunpack.c.l.b16 %v388
    %v1073 = vunpack.c.h.b16 %v388
    %v1074 = vunpack.c.l.b16 %v389
    %v1075 = vunpack.c.h.b16 %v389
    %v1076 = vunpack.c.l.b16 %v390
    %v1077 = vunpack.c.h.b16 %v390
    %v1078 = vunpack.c.l.b16 %v391
    %v1079 = vunpack.c.h.b16 %v391
    %v1080 = vunpack.c.l.b16 %v392
    %v1081 = vunpack.c.h.b16 %v392
    %v1082 = vunpack.c.l.b16 %v393
    %v1083 = vunpack.c.h.b16 %v393
    %v1084 = vunpack.c.l.b16 %v394
    %v1085 = vunpack.c.h.b16 %v394
    %v1086 = vunpack.c.l.b16 %v395
    %v1087 = vunpack.c.h.b16 %v395
    %v1088 = vunpack.c.l.b16 %v396
    %v1089 = vunpack.c.h.b16 %v396
    %v1090 = vunpack.c.l.b16 %v397
    %v1091 = vunpack.c.h.b16 %v397
    %v1092 = vunpack.c.l.b16 %v398
    %v1093 = vunpack.c.h.b16 %v398
    %v1094 = vunpack.c.l.b16 %v399
    %v1095 = vunpack.c.h.b16 %v399
    %v1096 = vunpack.c.l.b16 %v400
    %v1097 = vunpack.c.h.b16 %v400
    %v1098 = vunpack.c.l.b16 %v401
    %v1099 = vunpack.c.h.b16 %v401
    %v1100 = vunpack.c.l.b16 %v402
    %v1101 = vunpack.c.h.b16 %v402
    %v1102 = vunpack.c.l.b16 %v403
    %v1103 = vunpack.c.h.b16 %v403
    %v1104 = vunpack.c.l.b16 %v404
    %v1105 = vunpack.c.h.b16 %v404
    %v1106 = vpack.c.b16 %v980, %v978
    %v1107 = vpack.c.b16 %v981, %v979
    %v1108 = vpack.c.b16 %v984, %v982
    %v1109 = vpack.c.b16 %v985, %v983
    %v1110 = vpack.c.b16 %v988, %v986
    %v1111 = vpack.c.b16 %v989, %v987
    %v1112 = vpack.c.b16 %v992, %v990
    %v1113 = vpack.c.b16 %v993, %v991
    %v1114 = vpack.c.b16 %v996, %v994
    %v1115 = vpack.c.b16 %v997, %v995
    %v1116 = vpack.c.b16 %v1000, %v998
    %v1117 = vpack.c.b16 %v1001, %v999
    %v1118 = vpack.c.b16 %v1004, %v1002
    %v1119 = vpack.c.b16 %v1005, %v1003
    %v1120 = vpack.c.b16 %v1008, %v1006
    %v1121 = vpack.c.b16 %v1009, %v1007
    %v1122 = vpack.c.b16 %v1012, %v1010
    %v1123 = vpack.c.b16 %v1013, %v1011
    %v1124 = vpack.c.b16 %v1016, %v1014
    %v1125 = vpack.c.b16 %v1017, %v1015
    %v1126 = vpack.c.b16 %v1020, %v1018
    %v1127 = vpack.c.b16 %v1021, %v1019
    %v1128 = vpack.c.b16 %v1024, %v1022
    %v1129 = vpack.c.b16 %v1025, %v1023
    %v1130 = vpack.c.b16 %v1028, %v1026
    %v1131 = vpack.c.b16 %v1029, %v1027
    %v1132 = vpack.c.b16 %v1032, %v1030
    %v1133 = vpack.c.b16 %v1033, %v1031
    %v1134 = vpack.c.b16 %v1036, %v1034
    %v1135 = vpack.c.b16 %v1037, %v1035
    %v1136 = vpack.c.b16 %v1040, %v1038
    %v1137 = vpack.c.b16 %v1041, %v1039
    %v1138 = vpack.c.b16 %v1044, %v1042
    %v1139 = vpack.c.b16 %v1045, %v1043
    %v1140 = vpack.c.b16 %v1048, %v1046
    %v1141 = vpack.c.b16 %v1049, %v1047
    %v1142 = vpack.c.b16 %v1052, %v1050
    %v1143 = vpack.c.b16 %v1053, %v1051
    %v1144 = vpack.c.b16 %v1056, %v1054
    %v1145 = vpack.c.b16 %v1057, %v1055
    %v1146 = vpack.c.b16 %v1060, %v1058
    %v1147 = vpack.c.b16 %v1061, %v1059
    %v1148 = vpack.c.b16 %v1064, %v1062
    %v1149 = vpack.c.b16 %v1065, %v1063
    %v1150 = vpack.c.b16 %v1068, %v1066
    %v1151 = vpack.c.b16 %v1069, %v1067
    %v1152 = vpack.c.b16 %v1072, %v1070
    %v1153 = vpack.c.b16 %v1073, %v1071
    %v1154 = vpack.c.b16 %v1076, %v1074
    %v1155 = vpack.c.b16 %v1077, %v1075
    %v1156 = vpack.c.b16 %v1080, %v1078
    %v1157 = vpack.c.b16 %v1081, %v1079
    %v1158 = vpack.c.b16 %v1084, %v1082
    %v1159 = vpack.c.b16 %v1085, %v1083
    %v1160 = vpack.c.b16 %v1088, %v1086
    %v1161 = vpack.c.b16 %v1089, %v1087
    %v1162 = vpack.c.b16 %v1092, %v1090
    %v1163 = vpack.c.b16 %v1093, %v1091
    %v1164 = vpack.c.b16 %v1096, %v1094
    %v1165 = vpack.c.b16 %v1097, %v1095
    %v1166 = vpack.c.b16 %v1100, %v1098
    %v1167 = vpack.c.b16 %v1101, %v1099
    %v1168 = vpack.c.b16 %v1104, %v1102
    %v1169 = vpack.c.b16 %v1105, %v1103
    %1234 = vmatpush.bf16.msra.mxu0 %v1120
    %1235 = vmatpush.bf16.msra.mxu0 %v1118
    %1236 = vmatpush.bf16.msra.mxu0 %v1116
    %1237 = vmatpush.bf16.msra.mxu0 %v1114
    %1238 = vmatpush.bf16.msra.mxu0 %v1112
    %1239 = vmatpush.bf16.msra.mxu0 %v1110
    %1240 = vmatpush.bf16.msra.mxu0 %v1108
    %1241 = vmatpush.bf16.msra.mxu0 %v1106
    %1242 = vmatmul.bf16.gmra.mxu0 %v906
    %v1243 = vpop.f32.mrf.mxu0
    %v1244 = vadd.f32 %v849, %v1243
    %v1245 = vpop.f32.mrf.mxu0
    %1246 = vdwg.mxu0
    %1247 = vmatpush.bf16.msra.mxu0 %v1136
    %1248 = vmatpush.bf16.msra.mxu0 %v1134
    %1249 = vmatpush.bf16.msra.mxu0 %v1132
    %1250 = vmatpush.bf16.msra.mxu0 %v1130
    %1251 = vmatpush.bf16.msra.mxu0 %v1128
    %1252 = vmatpush.bf16.msra.mxu0 %v1126
    %1253 = vmatpush.bf16.msra.mxu0 %v1124
    %1254 = vmatpush.bf16.msra.mxu0 %v1122
    %1255 = vmatmul.bf16.gmra.mxu0 %v907
    %v1256 = vpop.f32.mrf.mxu0
    %v1257 = vadd.f32 %v1244, %v1256
    %v1258 = vpop.f32.mrf.mxu0
    %1259 = vdwg.mxu0
    %1260 = vmatpush.bf16.msra.mxu0 %v1152
    %1261 = vmatpush.bf16.msra.mxu0 %v1150
    %1262 = vmatpush.bf16.msra.mxu0 %v1148
    %1263 = vmatpush.bf16.msra.mxu0 %v1146
    %1264 = vmatpush.bf16.msra.mxu0 %v1144
    %1265 = vmatpush.bf16.msra.mxu0 %v1142
    %1266 = vmatpush.bf16.msra.mxu0 %v1140
    %1267 = vmatpush.bf16.msra.mxu0 %v1138
    %1268 = vmatmul.bf16.gmra.mxu0 %v908
    %v1269 = vpop.f32.mrf.mxu0
    %v1270 = vadd.f32 %v1257, %v1269
    %v1271 = vpop.f32.mrf.mxu0
    %1272 = vdwg.mxu0
    %1273 = vmatpush.bf16.msra.mxu0 %v1168
    %1274 = vmatpush.bf16.msra.mxu0 %v1166
    %1275 = vmatpush.bf16.msra.mxu0 %v1164
    %1276 = vmatpush.bf16.msra.mxu0 %v1162
    %1277 = vmatpush.bf16.msra.mxu0 %v1160
    %1278 = vmatpush.bf16.msra.mxu0 %v1158
    %1279 = vmatpush.bf16.msra.mxu0 %v1156
    %1280 = vmatpush.bf16.msra.mxu0 %v1154
    %1281 = vmatmul.bf16.gmra.mxu0 %v909
    %v1282 = vpop.f32.mrf.mxu0
    %v1283 = vadd.f32 %v1270, %v1282
    %v1284 = vpop.f32.mrf.mxu0
    %1285 = vdwg.mxu0
    %1286 = vmatpush.bf16.msra.mxu0 %v1121
    %1287 = vmatpush.bf16.msra.mxu0 %v1119
    %1288 = vmatpush.bf16.msra.mxu0 %v1117
    %1289 = vmatpush.bf16.msra.mxu0 %v1115
    %1290 = vmatpush.bf16.msra.mxu0 %v1113
    %1291 = vmatpush.bf16.msra.mxu0 %v1111
    %1292 = vmatpush.bf16.msra.mxu0 %v1109
    %1293 = vmatpush.bf16.msra.mxu0 %v1107
    %1294 = vmatmul.bf16.gmra.mxu0 %v906
    %v1295 = vpop.f32.mrf.mxu0
    %v1296 = vadd.f32 %v901, %v1295
    %v1297 = vpop.f32.mrf.mxu0
    %1298 = vdwg.mxu0
    %1299 = vmatpush.bf16.msra.mxu0 %v1137
    %1300 = vmatpush.bf16.msra.mxu0 %v1135
    %1301 = vmatpush.bf16.msra.mxu0 %v1133
    %1302 = vmatpush.bf16.msra.mxu0 %v1131
    %1303 = vmatpush.bf16.msra.mxu0 %v1129
    %1304 = vmatpush.bf16.msra.mxu0 %v1127
    %1305 = vmatpush.bf16.msra.mxu0 %v1125
    %1306 = vmatpush.bf16.msra.mxu0 %v1123
    %1307 = vmatmul.bf16.gmra.mxu0 %v907
    %v1308 = vpop.f32.mrf.mxu0
    %v1309 = vadd.f32 %v1296, %v1308
    %v1310 = vpop.f32.mrf.mxu0
    %1311 = vdwg.mxu0
    %1312 = vmatpush.bf16.msra.mxu0 %v1153
    %1313 = vmatpush.bf16.msra.mxu0 %v1151
    %1314 = vmatpush.bf16.msra.mxu0 %v1149
    %1315 = vmatpush.bf16.msra.mxu0 %v1147
    %1316 = vmatpush.bf16.msra.mxu0 %v1145
    %1317 = vmatpush.bf16.msra.mxu0 %v1143
    %1318 = vmatpush.bf16.msra.mxu0 %v1141
    %1319 = vmatpush.bf16.msra.mxu0 %v1139
    %1320 = vmatmul.bf16.gmra.mxu0 %v908
    %v1321 = vpop.f32.mrf.mxu0
    %v1322 = vadd.f32 %v1309, %v1321
    %v1323 = vpop.f32.mrf.mxu0
    %1324 = vdwg.mxu0
    %1325 = vmatpush.bf16.msra.mxu0 %v1169
    %1326 = vmatpush.bf16.msra.mxu0 %v1167
    %1327 = vmatpush.bf16.msra.mxu0 %v1165
    %1328 = vmatpush.bf16.msra.mxu0 %v1163
    %1329 = vmatpush.bf16.msra.mxu0 %v1161
    %1330 = vmatpush.bf16.msra.mxu0 %v1159
    %1331 = vmatpush.bf16.msra.mxu0 %v1157
    %1332 = vmatpush.bf16.msra.mxu0 %v1155
    %1333 = vmatmul.bf16.gmra.mxu0 %v909
    %v1334 = vpop.f32.mrf.mxu0
    %v1335 = vadd.f32 %v1322, %v1334
    %v1336 = vpop.f32.mrf.mxu0
    %1337 = vdwg.mxu0
    %v1338 = vpack.c.bf16 %v339, %v339
    %v1339 = vld [vmem:[%s6] sm:$0xff]
    %v1340 = vld [vmem:[%s6 + $0x8] sm:$0xff]
    %v1341 = vld [vmem:[%s6 + $0x10] sm:$0xff]
    %v1342 = vld [vmem:[%s6 + $0x18] sm:$0xff]
    %v1343 = vld [vmem:[%s6 + $0x20] sm:$0xff]
    %v1344 = vld [vmem:[%s6 + $0x28] sm:$0xff]
    %v1345 = vld [vmem:[%s6 + $0x30] sm:$0xff]
    %v1346 = vld [vmem:[%s6 + $0x38] sm:$0xff]
    %v1347 = vld [vmem:[%s6 + $0x40] sm:$0xff]
    %v1348 = vld [vmem:[%s6 + $0x48] sm:$0xff]
    %v1349 = vld [vmem:[%s6 + $0x50] sm:$0xff]
    %v1350 = vld [vmem:[%s6 + $0x58] sm:$0xff]
    %v1351 = vld [vmem:[%s6 + $0x60] sm:$0xff]
    %v1352 = vld [vmem:[%s6 + $0x68] sm:$0xff]
    %v1353 = vld [vmem:[%s6 + $0x70] sm:$0xff]
    %v1354 = vld [vmem:[%s6 + $0x78] sm:$0xff]
    %v1371 = vunpack.c.l.b16 %v1339
    %v1372 = vunpack.c.h.b16 %v1339
    %v1373 = vunpack.c.l.b16 %v1340
    %v1374 = vunpack.c.h.b16 %v1340
    %v1375 = vunpack.c.l.b16 %v1341
    %v1376 = vunpack.c.h.b16 %v1341
    %v1377 = vunpack.c.l.b16 %v1342
    %v1378 = vunpack.c.h.b16 %v1342
    %v1379 = vunpack.c.l.b16 %v1343
    %v1380 = vunpack.c.h.b16 %v1343
    %v1381 = vunpack.c.l.b16 %v1344
    %v1382 = vunpack.c.h.b16 %v1344
    %v1383 = vunpack.c.l.b16 %v1345
    %v1384 = vunpack.c.h.b16 %v1345
    %v1385 = vunpack.c.l.b16 %v1346
    %v1386 = vunpack.c.h.b16 %v1346
    %v1387 = vunpack.c.l.b16 %v1347
    %v1388 = vunpack.c.h.b16 %v1347
    %v1389 = vunpack.c.l.b16 %v1348
    %v1390 = vunpack.c.h.b16 %v1348
    %v1391 = vunpack.c.l.b16 %v1349
    %v1392 = vunpack.c.h.b16 %v1349
    %v1393 = vunpack.c.l.b16 %v1350
    %v1394 = vunpack.c.h.b16 %v1350
    %v1395 = vunpack.c.l.b16 %v1351
    %v1396 = vunpack.c.h.b16 %v1351
    %v1397 = vunpack.c.l.b16 %v1352
    %v1398 = vunpack.c.h.b16 %v1352
    %v1399 = vunpack.c.l.b16 %v1353
    %v1400 = vunpack.c.h.b16 %v1353
    %v1401 = vunpack.c.l.b16 %v1354
    %v1402 = vunpack.c.h.b16 %v1354
    %v1403 = vpack.c.b16 %v1373, %v1371
    %v1404 = vpack.c.b16 %v1374, %v1372
    %v1405 = vpack.c.b16 %v1377, %v1375
    %v1406 = vpack.c.b16 %v1378, %v1376
    %v1407 = vpack.c.b16 %v1381, %v1379
    %v1408 = vpack.c.b16 %v1382, %v1380
    %v1409 = vpack.c.b16 %v1385, %v1383
    %v1410 = vpack.c.b16 %v1386, %v1384
    %v1411 = vpack.c.b16 %v1389, %v1387
    %v1412 = vpack.c.b16 %v1390, %v1388
    %v1413 = vpack.c.b16 %v1393, %v1391
    %v1414 = vpack.c.b16 %v1394, %v1392
    %v1415 = vpack.c.b16 %v1397, %v1395
    %v1416 = vpack.c.b16 %v1398, %v1396
    %v1417 = vpack.c.b16 %v1401, %v1399
    %v1418 = vpack.c.b16 %v1402, %v1400
    %1435 = vmatpush.bf16.msra.mxu0 %v1417
    %1436 = vmatpush.bf16.msra.mxu0 %v1415
    %1437 = vmatpush.bf16.msra.mxu0 %v1413
    %1438 = vmatpush.bf16.msra.mxu0 %v1411
    %1439 = vmatpush.bf16.msra.mxu0 %v1409
    %1440 = vmatpush.bf16.msra.mxu0 %v1407
    %1441 = vmatpush.bf16.msra.mxu0 %v1405
    %1442 = vmatpush.bf16.msra.mxu0 %v1403
    %1443 = vmatmul.bf16.gmra.mxu0 %v1338
    %v1444 = vpop.f32.mrf.mxu0
    %v1445 = vadd.f32 0.0, %v1444
    %v1446 = vpop.f32.mrf.mxu0
    %1447 = vdwg.mxu0
    %1448 = vmatpush.bf16.msra.mxu0 %v1418
    %1449 = vmatpush.bf16.msra.mxu0 %v1416
    %1450 = vmatpush.bf16.msra.mxu0 %v1414
    %1451 = vmatpush.bf16.msra.mxu0 %v1412
    %1452 = vmatpush.bf16.msra.mxu0 %v1410
    %1453 = vmatpush.bf16.msra.mxu0 %v1408
    %1454 = vmatpush.bf16.msra.mxu0 %v1406
    %1455 = vmatpush.bf16.msra.mxu0 %v1404
    %1456 = vmatmul.bf16.gmra.mxu0 %v1338
    %v1457 = vpop.f32.mrf.mxu0
    %v1458 = vadd.f32 0.0, %v1457
    %v1459 = vpop.f32.mrf.mxu0
    %1460 = vdwg.mxu0
    %v1461 = vadd.f32 %v1283, %v1445
    %v1462 = vadd.f32 %v1335, %v1458
    %v1463 = vld [vmem:[%s7] sm:$0x3]
    %v1465 = vperm.slane %v1463, 0
    %v1466 = vperm.slane %v1463, 1
    %v1469 = vadd.f32 %v1461, %v1465
    %v1470 = vadd.f32 %v1462, %v1466
    %v1471 = vmax.f32 %v1469, 0.0
    %v1472 = vmax.f32 %v1470, 0.0
    %v1473 = vld [vmem:[%s8] sm:$0xff]
    %v1474 = vld [vmem:[%s8 + $0x8] sm:$0xff]
    %v1475 = vld [vmem:[%s8 + $0x10] sm:$0xff]
    %v1476 = vld [vmem:[%s8 + $0x18] sm:$0xff]
    %v1477 = vld [vmem:[%s8 + $0x20] sm:$0xff]
    %v1478 = vld [vmem:[%s8 + $0x28] sm:$0xff]
    %v1479 = vld [vmem:[%s8 + $0x30] sm:$0xff]
    %v1480 = vld [vmem:[%s8 + $0x38] sm:$0xff]
    %v1481 = vld [vmem:[%s8 + $0x40] sm:$0xff]
    %v1482 = vld [vmem:[%s8 + $0x48] sm:$0xff]
    %v1483 = vld [vmem:[%s8 + $0x50] sm:$0xff]
    %v1484 = vld [vmem:[%s8 + $0x58] sm:$0xff]
    %v1485 = vld [vmem:[%s8 + $0x60] sm:$0xff]
    %v1486 = vld [vmem:[%s8 + $0x68] sm:$0xff]
    %v1487 = vld [vmem:[%s8 + $0x70] sm:$0xff]
    %v1488 = vld [vmem:[%s8 + $0x78] sm:$0xff]
    %v1489 = vld [vmem:[%s8 + $0x80] sm:$0xff]
    %v1490 = vld [vmem:[%s8 + $0x88] sm:$0xff]
    %v1491 = vld [vmem:[%s8 + $0x90] sm:$0xff]
    %v1492 = vld [vmem:[%s8 + $0x98] sm:$0xff]
    %v1493 = vld [vmem:[%s8 + $0xa0] sm:$0xff]
    %v1494 = vld [vmem:[%s8 + $0xa8] sm:$0xff]
    %v1495 = vld [vmem:[%s8 + $0xb0] sm:$0xff]
    %v1496 = vld [vmem:[%s8 + $0xb8] sm:$0xff]
    %v1497 = vld [vmem:[%s8 + $0xc0] sm:$0xff]
    %v1498 = vld [vmem:[%s8 + $0xc8] sm:$0xff]
    %v1499 = vld [vmem:[%s8 + $0xd0] sm:$0xff]
    %v1500 = vld [vmem:[%s8 + $0xd8] sm:$0xff]
    %v1501 = vld [vmem:[%s8 + $0xe0] sm:$0xff]
    %v1502 = vld [vmem:[%s8 + $0xe8] sm:$0xff]
    %v1503 = vld [vmem:[%s8 + $0xf0] sm:$0xff]
    %v1504 = vld [vmem:[%s8 + $0xf8] sm:$0xff]
    %v1505 = vld [vmem:[%s9] sm:$0x1]
    %v1507 = vperm.slane %v1505, 0
    %1509 = vmatpush.msra.mxu0 %v1488
    %1510 = vmatpush.msra.mxu0 %v1487
    %1511 = vmatpush.msra.mxu0 %v1486
    %1512 = vmatpush.msra.mxu0 %v1485
    %1513 = vmatpush.msra.mxu0 %v1484
    %1514 = vmatpush.msra.mxu0 %v1483
    %1515 = vmatpush.msra.mxu0 %v1482
    %1516 = vmatpush.msra.mxu0 %v1481
    %1517 = vmatpush.msra.mxu0 %v1480
    %1518 = vmatpush.msra.mxu0 %v1479
    %1519 = vmatpush.msra.mxu0 %v1478
    %1520 = vmatpush.msra.mxu0 %v1477
    %1521 = vmatpush.msra.mxu0 %v1476
    %1522 = vmatpush.msra.mxu0 %v1475
    %1523 = vmatpush.msra.mxu0 %v1474
    %1524 = vmatpush.msra.mxu0 %v1473
    %1525 = vmatmul.f32.gmra.mxu0 %v1471
    %v1526 = vpop.f32.mrf.mxu0
    %v1527 = vadd.f32 %v1507, %v1526
    %1528 = vdwg.mxu0
    %1529 = vmatpush.msra.mxu0 %v1504
    %1530 = vmatpush.msra.mxu0 %v1503
    %1531 = vmatpush.msra.mxu0 %v1502
    %1532 = vmatpush.msra.mxu0 %v1501
    %1533 = vmatpush.msra.mxu0 %v1500
    %1534 = vmatpush.msra.mxu0 %v1499
    %1535 = vmatpush.msra.mxu0 %v1498
    %1536 = vmatpush.msra.mxu0 %v1497
    %1537 = vmatpush.msra.mxu0 %v1496
    %1538 = vmatpush.msra.mxu0 %v1495
    %1539 = vmatpush.msra.mxu0 %v1494
    %1540 = vmatpush.msra.mxu0 %v1493
    %1541 = vmatpush.msra.mxu0 %v1492
    %1542 = vmatpush.msra.mxu0 %v1491
    %1543 = vmatpush.msra.mxu0 %v1490
    %1544 = vmatpush.msra.mxu0 %v1489
    %1545 = vmatmul.f32.gmra.mxu0 %v1472
    %v1546 = vpop.f32.mrf.mxu0
    %v1547 = vadd.f32 %v1527, %v1546
    %1548 = vdwg.mxu0
    %vm1549 = vcmask 17408
    %1550 = vst.msk [vmem:[#allocation8] sm:$0x3] %vm1549, %v1547
    // Predicated region
    $region54: #{tpu_custom_call.1} parent=1 // pred_check
      _
    $region55: #{tpu_custom_call.1} parent=1 // pred_check_branch
      %1552 = sbr.rel (0) target = $region57
    $region56: #{tpu_custom_call.1} parent=1 // pred_region
      %1554 = vsyncadd [#allocation4], 0
      %s1556 = sshll.u32 [#allocation8], 4
      %s1557 = int_to_ptr.vmem [resolvable:$true] %s1556
      %s1558 = sshll.u32 %s10, 4
      %s1559 = int_to_ptr.hbm [resolvable:$true] %s1558
      %1561 = dma.vmem_to_hbm [thread:$0]  %s1557, 32, %s1559, [#allocation4]
    $region57: #{tpu_custom_call.1} parent=1 // pred_fallthru
      _
    // Predicated region
    $region58: #{tpu_custom_call.1} parent=1 // pred_check
      _
    $region59: #{tpu_custom_call.1} parent=1 // pred_check_branch
      %1563 = sbr.rel (0) target = $region61
    $region60: #{tpu_custom_call.1} parent=1 // pred_region
      %1565 = dma.done [#allocation4], 32
    $region61: #{tpu_custom_call.1} parent=1 // pred_fallthru
      _
    %1566 = vsyncpa [#allocation3], 1
    %1567 = vsyncpa [#allocation6], 1
    %1568 = vsyncpa [#allocation4], 1

</llo_original>
